<compile_context>
chip_gen: v7x
topology: tpu7x:2x2x1
jax: 0.10.0
libtpu: 0.0.40
codegen_flags: <defaults>
</compile_context>

<pallas_src>
import jax
import jax.numpy as jnp
import numpy as np
from jax import lax
from jax.experimental import pallas as pl
from jax.experimental.pallas import tpu as pltpu


def _round_up(n, m):
    return ((n + m - 1) // m) * m


# ---------------------------------------------------------------------------------------
# Kernel
# ---------------------------------------------------------------------------------------
def hann_kernel(
    x_ref,       # (S*Bp, H)  f32   intra_outputs, batch-padded & time-flattened
    elm_ref,     # (Bp, H)    f32   itemEmb(item) * userEmb(user)
    h0_ref,      # (Bp, W)    f32   initial GRU hidden (real state in lanes [0,H))
    wih_ref,     # (H, W)     bf16  GRU W_ih^T packed [r | z | n | z-dup]
    whh_ref,     # (W, W)     bf16  GRU W_hh^T packed, rows [H,W) zero
    bi_ref,      # (1, W)     f32   [bih_r+bhh_r | bih_z+bhh_z | bih_n | bih_z+bhh_z]
    bhhn_ref,    # (1, W)     f32   bhh_n at lanes [0,H), zero elsewhere
    w3_ref,      # (W, H)     bf16  linear3^T, rows [H,W) zero
    b3_ref,      # (1, H)     f32
    w4_ref,      # (H, H)     bf16  linear4^T
    b4_ref,      # (1, H)     f32
    wb_ref,      # (1, H)     f32   linear_beta weight row (bias dropped: softmax-invariant)
    wda_ref,     # (W, 2K)    bf16  fc_doubleK half applied to outputs_sum, rows [H,W) zero
    wdb_ref,     # (H, 2K)    bf16  fc_doubleK half applied to elm
    bd_ref,      # (1, 2K)    f32
    wsk_ref,     # (2K, K)    bf16  fc_singleK^T
    bsk_ref,     # (1, K)     f32
    wo_ref,      # (1, K)     f32   fc_out weight row
    bo_ref,      # (1,) SMEM  f32   fc_out bias
    sig_ref,     # out (Bp, 1)      sigmoid_outputs (padded)
    hid_ref,     # out (Bp, W)      final GRU hidden (padded; real in lanes [0,H))
    attn_ref,    # out (S, Bp, 1)   inter_attn_score
):
    S, Bp, _ = attn_ref.shape
    H = elm_ref.shape[1]
    W = h0_ref.shape[1]          # = 4*H, packed gate width
    bf16 = jnp.bfloat16
    f32 = jnp.float32

    # ----- hoisted GRU input projection: one MXU call, biases folded --------------------
    gi_all = jnp.dot(x_ref[...].astype(bf16), wih_ref[...],
                     preferred_element_type=f32) + bi_ref[...]              # (S*Bp, W)
    # Pre-align the n-gate block to the hidden "home" lanes [0,H): one hoisted roll.
    # Shift 2H == W/2 is congruent to -W/2, so it is rotate-direction agnostic.
    gi_n_all = pltpu.roll(gi_all, 2 * H, axis=1)

    whh = whh_ref[...]
    bhhn = bhhn_ref[...]

    # ----- GRU recurrence (PyTorch gate order), fully unrolled, one MXU dot / step ------
    # TODO(synk): keep whh stationary with explicit MXU driving (push_rhs once, acc/pop
    #             per step) to take the RHS push off the serial chain.
    h = h0_ref[...]              # (Bp, W); lanes [H,W) are inert (all consumer weight rows zero)
    outs = []
    for t in range(S):           # static & small -> full unroll for LLO visibility
        lo = t * Bp
        gi_t = gi_all[lo:lo + Bp, :]        # sublane-tile-aligned static slices
        gi_n = gi_n_all[lo:lo + Bp, :]
        gh = jnp.dot(h.astype(bf16), whh, preferred_element_type=f32)       # (Bp, W)
        sg = jax.nn.sigmoid(gi_t + gh)      # lanes [0,H)=r, [H,2H)=z, [3H,W)=z (dup)
        gh_n = pltpu.roll(gh, 2 * H, axis=1)          # n block -> lanes [0,H) (dir-agnostic)
        n = jnp.tanh(gi_n + sg * (gh_n + bhhn))       # r (= sg lanes [0,H)) stays in place
        z = pltpu.roll(sg, H, axis=1)                 # z -> lanes [0,H); correct for either
                                                      # rotate direction thanks to the z-dup
        h = (1.0 - z) * n + z * h
        outs.append(h)
    hid_ref[...] = h

    outs_flat = jnp.concatenate(outs, axis=0)          # (S*Bp, W), lives in vregs (no scratch)

    # ----- dualFC attention --------------------------------------------------------------
    elm = elm_ref[...]
    k3 = jnp.dot(outs_flat.astype(bf16), w3_ref[...],
                 preferred_element_type=f32) + b3_ref[...]                  # (S*Bp, H)
    q = jnp.dot(elm.astype(bf16), w4_ref[...],
                preferred_element_type=f32) + b4_ref[...]                   # (Bp, H)
    xact = jnp.maximum(k3.reshape(S, Bp, H) + q[None, :, :], 0.0)           # relu

    # linear_beta as a lane reduction; batch stays on sublanes: score is (S, Bp, 1).
    # (linear_beta's bias is omitted: softmax over dim 0 is shift-invariant.)
    score = jnp.sum(xact * wb_ref[...][None, :, :], axis=-1, keepdims=True)

    # softmax over time (dim 0); divide on the EUP via approx reciprocal
    m = jnp.max(score, axis=0, keepdims=True)
    e = jnp.exp(score - m)
    attn = e * pl.reciprocal(jnp.sum(e, axis=0, keepdims=True), approx=True)
    attn_ref[...] = attn

    # ----- weighted sum + FC head --------------------------------------------------------
    outputs_sum = jnp.sum(attn * outs_flat.reshape(S, Bp, W), axis=0)       # (Bp, W)

    # fc_doubleK without a lane-axis concat: split weight, two dots, one accumulator
    h1 = (jnp.dot(outputs_sum.astype(bf16), wda_ref[...], preferred_element_type=f32)
          + jnp.dot(elm.astype(bf16), wdb_ref[...], preferred_element_type=f32)
          + bd_ref[...])                                                    # (Bp, 2K)
    h2 = jnp.dot(h1.astype(bf16), wsk_ref[...],
                 preferred_element_type=f32) + bsk_ref[...]                 # (Bp, K)
    logit = jnp.sum(h2 * wo_ref[...], axis=-1, keepdims=True) + bo_ref[0]   # (Bp, 1)
    sig_ref[...] = jax.nn.sigmoid(logit)


# ---------------------------------------------------------------------------------------
# One-time parameter repack (perf-review item #1: do NOT rebuild these per forward call)
# ---------------------------------------------------------------------------------------
def pack_hann_params(params, mxu_dtype=jnp.bfloat16):
    """Repack PyTorch-convention weights into TPU-friendly layouts ONCE (cache at init)."""
    H = params['w3'].shape[0]
    W = 4 * H                        # packed gate width: [r | z | n | z-dup]

    def gate_cols(w):                # (3H, H) -> transposed per-gate column blocks (H, H)
        wt = w.T
        return wt[:, :H], wt[:, H:2 * H], wt[:, 2 * H:]

    ir, iz, inn = gate_cols(params['wih'])
    hr, hz, hn = gate_cols(params['whh'])
    wih_p = jnp.concatenate([ir, iz, inn, iz], axis=1).astype(mxu_dtype)          # (H, W)
    whh_p = jnp.pad(jnp.concatenate([hr, hz, hn, hz], axis=1),
                    ((0, W - H), (0, 0))).astype(mxu_dtype)                        # (W, W)

    bih, bhh = params['bih'], params['bhh']
    bz = bih[:, H:2 * H] + bhh[:, H:2 * H]
    bi_p = jnp.concatenate([bih[:, :H] + bhh[:, :H], bz, bih[:, 2 * H:], bz], axis=1)  # (1, W)
    bhhn_p = jnp.pad(bhh[:, 2 * H:], ((0, 0), (0, W - H)))                         # (1, W)

    w3_p = jnp.pad(params['w3'].T, ((0, W - H), (0, 0))).astype(mxu_dtype)         # (W, H)
    w4_p = params['w4'].T.astype(mxu_dtype)                                        # (H, H)

    wd = params['wd']                                                              # (2K, 2H)
    wda_p = jnp.pad(wd[:, :H].T, ((0, W - H), (0, 0))).astype(mxu_dtype)           # (W, 2K)
    wdb_p = wd[:, H:].T.astype(mxu_dtype)                                          # (H, 2K)
    wsk_p = params['wsk'].T.astype(mxu_dtype)                                      # (2K, K)

    return dict(
        wih=wih_p, whh=whh_p, bi=bi_p, bhhn=bhhn_p,
        w3=w3_p, b3=params['b3'], w4=w4_p, b4=params['b4'],
        wb=params['wb'],
        wda=wda_p, wdb=wdb_p, bd=params['bd'],
        wsk=wsk_p, bsk=params['bsk'],
        wo=params['wo'], bo=params['bo'].reshape(1),
    )


def hann_forward(x, elm, h0, pk):
    """x: (S, B, H) time-major; elm/h0: (B, H); pk: output of pack_hann_params."""
    S, B, H = x.shape
    W = pk['whh'].shape[0]               # 4*H
    Bp = _round_up(max(B, 8), 8)         # sublane-aligned batch

    x_p = jnp.pad(x, ((0, 0), (0, Bp - B), (0, 0))).reshape(S * Bp, H)
    elm_p = jnp.pad(elm, ((0, Bp - B), (0, 0)))
    h0_p = jnp.pad(h0, ((0, Bp - B), (0, W - H)))

    vmem = pl.BlockSpec(memory_space=pltpu.MemorySpace.VMEM)
    smem = pl.BlockSpec(memory_space=pltpu.MemorySpace.SMEM)

    ins = (x_p, elm_p, h0_p,
           pk['wih'], pk['whh'], pk['bi'], pk['bhhn'],
           pk['w3'], pk['b3'], pk['w4'], pk['b4'], pk['wb'],
           pk['wda'], pk['wdb'], pk['bd'], pk['wsk'], pk['bsk'], pk['wo'],
           pk['bo'])
    in_specs = [vmem] * 18 + [smem]

    out_shapes = (
        jax.ShapeDtypeStruct((Bp, 1), jnp.float32),     # sigmoid_outputs (padded)
        jax.ShapeDtypeStruct((Bp, W), jnp.float32),     # final hidden (padded)
        jax.ShapeDtypeStruct((S, Bp, 1), jnp.float32),  # attention, batch on sublanes
    )

    sig_p, hid_p, attn_p = pl.pallas_call(
        hann_kernel,
        out_shape=out_shapes,
        in_specs=in_specs,
        out_specs=(vmem, vmem, vmem),
    )(*ins)

    # Slice padding off and restore the module's output shapes.
    sig = sig_p[:B, :]                      # (B, 1)
    hidden = hid_p[:B, :H][None, :, :]      # (1, B, H)
    attn = attn_p[:, :B, :]                 # (S, B, 1)
    return sig, hidden, attn


# ---------------------------------------------------------------------------------------
# Pure-JAX reference mirroring the PyTorch module semantics (f32 throughout)
# ---------------------------------------------------------------------------------------
def reference_forward(x, elm, h0, p):
    S, B, H = x.shape

    def step(h, x_t):
        gi = x_t @ p['wih'].T + p['bih'][0]
        gh = h @ p['whh'].T + p['bhh'][0]
        r = jax.nn.sigmoid(gi[:, :H] + gh[:, :H])
        z = jax.nn.sigmoid(gi[:, H:2 * H] + gh[:, H:2 * H])
        n = jnp.tanh(gi[:, 2 * H:] + r * gh[:, 2 * H:])
        h_new = (1 - z) * n + z * h
        return h_new, h_new

    h_final, outs = lax.scan(step, h0, x)
    k = outs @ p['w3'].T + p['b3'][0]
    q = elm @ p['w4'].T + p['b4'][0]
    xact = jnp.maximum(k + q[None], 0.0)
    score = xact @ p['wb'].T + p['bb'][0]
    attn = jax.nn.softmax(score, axis=0)
    out_sum = jnp.sum(attn * outs, axis=0)
    cat = jnp.concatenate([out_sum, elm], axis=1)
    h1 = cat @ p['wd'].T + p['bd'][0]
    h2 = h1 @ p['wsk'].T + p['bsk'][0]
    h3 = h2 @ p['wo'].T + p['bo'][0]
    return jax.nn.sigmoid(h3), h_final[None], attn


if __name__ == "__main__":
    # Small, module-consistent shapes.
    S, B, H, K = 8, 2, 32, 64            # seq_len, batch, hidden_size, latentK
    NUM_ITEMS, NUM_USERS = 10, 10

    key = jax.random.PRNGKey(0)
    ks = jax.random.split(key, 20)

    def init(k, shape, scale=0.1):
        return jax.random.normal(k, shape, dtype=jnp.float32) * scale

    params = {
        'wih': init(ks[0], (3 * H, H)),
        'whh': init(ks[1], (3 * H, H)),
        'bih': init(ks[2], (1, 3 * H)),
        'bhh': init(ks[3], (1, 3 * H)),
        'w3':  init(ks[4], (H, H)),
        'b3':  init(ks[5], (1, H)),
        'w4':  init(ks[6], (H, H)),
        'b4':  init(ks[7], (1, H)),
        'wb':  init(ks[8], (1, H)),
        'bb':  init(ks[9], (1, 1)),
        'wd':  init(ks[10], (2 * K, 2 * H)),
        'bd':  init(ks[11], (1, 2 * K)),
        'wsk': init(ks[12], (K, 2 * K)),
        'bsk': init(ks[13], (1, K)),
        'wo':  init(ks[14], (1, K)),
        'bo':  init(ks[15], (1, 1)),
    }

    item_emb_table = init(ks[16], (NUM_ITEMS, H), scale=1.0)
    user_emb_table = init(ks[17], (NUM_USERS, H), scale=1.0)

    intra_outputs = init(ks[18], (S, B, H), scale=1.0)    # (seq, batch, hidden)
    item_index = jnp.array([1, 3], dtype=jnp.int32)       # (B,)
    user_index = jnp.array([2, 5], dtype=jnp.int32)       # (B,)

    # Glue: embedding gathers + elementwise product (outside the kernel).
    elm_w_product_inter = item_emb_table[item_index] * user_emb_table[user_index]  # (B, H)
    h0 = jnp.zeros((B, H), dtype=jnp.float32)             # hidden=None -> zeros

    # Repack weights ONCE (cached at model init in a real deployment).
    packed = pack_hann_params(params)
    jax.block_until_ready(packed)

    sig, hidden, attn = hann_forward(intra_outputs, elm_w_product_inter, h0, packed)
    jax.block_until_ready((sig, hidden, attn))

    # Numerical check against the f32 reference. Tolerance reflects bf16 MXU operands
    # (f32 accumulation) and the approx-reciprocal softmax normalization.
    sig_r, hidden_r, attn_r = reference_forward(intra_outputs, elm_w_product_inter, h0, params)
    np.testing.assert_allclose(np.asarray(sig), np.asarray(sig_r), rtol=2e-2, atol=2e-2)
    np.testing.assert_allclose(np.asarray(hidden), np.asarray(hidden_r), rtol=2e-2, atol=2e-2)
    np.testing.assert_allclose(np.asarray(attn), np.asarray(attn_r), rtol=2e-2, atol=2e-2)

    assert sig.shape == (B, 1) and hidden.shape == (1, B, H) and attn.shape == (S, B, 1)
    print("KERNEL_OK")
</pallas_src>

<mosaic_0001>
module attributes {stable_mosaic.version = 11 : i64} {
  func.func @hann_kernel(%arg0: memref<64x32xf32, #tpu.memory_space<vmem>>, %arg1: memref<8x32xf32, #tpu.memory_space<vmem>>, %arg2: memref<8x128xf32, #tpu.memory_space<vmem>>, %arg3: memref<32x128xbf16, #tpu.memory_space<vmem>>, %arg4: memref<128x128xbf16, #tpu.memory_space<vmem>>, %arg5: memref<1x128xf32, #tpu.memory_space<vmem>>, %arg6: memref<1x128xf32, #tpu.memory_space<vmem>>, %arg7: memref<128x32xbf16, #tpu.memory_space<vmem>>, %arg8: memref<1x32xf32, #tpu.memory_space<vmem>>, %arg9: memref<32x32xbf16, #tpu.memory_space<vmem>>, %arg10: memref<1x32xf32, #tpu.memory_space<vmem>>, %arg11: memref<1x32xf32, #tpu.memory_space<vmem>>, %arg12: memref<128x128xbf16, #tpu.memory_space<vmem>>, %arg13: memref<32x128xbf16, #tpu.memory_space<vmem>>, %arg14: memref<1x128xf32, #tpu.memory_space<vmem>>, %arg15: memref<128x64xbf16, #tpu.memory_space<vmem>>, %arg16: memref<1x64xf32, #tpu.memory_space<vmem>>, %arg17: memref<1x64xf32, #tpu.memory_space<vmem>>, %arg18: memref<1xf32, #tpu.memory_space<smem>>, %arg19: memref<8x1xf32, #tpu.memory_space<vmem>>, %arg20: memref<8x128xf32, #tpu.memory_space<vmem>>, %arg21: memref<8x8x1xf32, #tpu.memory_space<vmem>>) attributes {dimension_semantics = [], scalar_prefetch = 0 : i64, scratch_operands = 0 : i64, tpu.core_type = #tpu.core_type<tc>} {
    %c0 = arith.constant 0 : index
    %c0_0 = arith.constant 0 : index
    %0 = vector.load %arg0[%c0, %c0_0] : memref<64x32xf32, #tpu.memory_space<vmem>>, vector<64x32xf32>
    %1 = arith.truncf %0 : vector<64x32xf32> to vector<64x32xbf16>
    %c0_1 = arith.constant 0 : index
    %c0_2 = arith.constant 0 : index
    %2 = vector.load %arg3[%c0_1, %c0_2] : memref<32x128xbf16, #tpu.memory_space<vmem>>, vector<32x128xbf16>
    %cst = arith.constant dense<0.000000e+00> : vector<64x128xf32>
    %3 = tpu.matmul %1, %2, %cst {dimension_numbers = #tpu.dot_dimension_numbers<[1], [0], [0], [1], [0, 0, 1, 1], [], []>} : vector<64x32xbf16>, vector<32x128xbf16>, vector<64x128xf32> -> vector<64x128xf32>
    %c0_3 = arith.constant 0 : index
    %c0_4 = arith.constant 0 : index
    %4 = vector.load %arg5[%c0_3, %c0_4] : memref<1x128xf32, #tpu.memory_space<vmem>>, vector<1x128xf32>
    %5 = vector.broadcast %4 : vector<1x128xf32> to vector<64x128xf32>
    %6 = arith.addf %3, %5 : vector<64x128xf32>
    %c64_i32 = arith.constant 64 : i32
    %7 = tpu.dynamic_rotate %6 by %c64_i32 dim 1 : vector<64x128xf32>, i32 -> vector<64x128xf32>
    %c0_5 = arith.constant 0 : index
    %c0_6 = arith.constant 0 : index
    %8 = vector.load %arg4[%c0_5, %c0_6] : memref<128x128xbf16, #tpu.memory_space<vmem>>, vector<128x128xbf16>
    %c0_7 = arith.constant 0 : index
    %c0_8 = arith.constant 0 : index
    %9 = vector.load %arg6[%c0_7, %c0_8] : memref<1x128xf32, #tpu.memory_space<vmem>>, vector<1x128xf32>
    %c0_9 = arith.constant 0 : index
    %c0_10 = arith.constant 0 : index
    %10 = vector.load %arg2[%c0_9, %c0_10] : memref<8x128xf32, #tpu.memory_space<vmem>>, vector<8x128xf32>
    %11 = vector.extract_strided_slice %6 {offsets = [0, 0], sizes = [8, 128], strides = [1, 1]} : vector<64x128xf32> to vector<8x128xf32>
    %12 = vector.extract_strided_slice %7 {offsets = [0, 0], sizes = [8, 128], strides = [1, 1]} : vector<64x128xf32> to vector<8x128xf32>
    %13 = arith.truncf %10 : vector<8x128xf32> to vector<8x128xbf16>
    %cst_11 = arith.constant dense<0.000000e+00> : vector<8x128xf32>
    %14 = tpu.matmul %13, %8, %cst_11 {dimension_numbers = #tpu.dot_dimension_numbers<[1], [0], [0], [1], [0, 0, 1, 1], [], []>} : vector<8x128xbf16>, vector<128x128xbf16>, vector<8x128xf32> -> vector<8x128xf32>
    %15 = arith.addf %11, %14 : vector<8x128xf32>
    %16 = arith.negf %15 : vector<8x128xf32>
    %17 = math.exp %16 : vector<8x128xf32>
    %cst_12 = arith.constant 1.000000e+00 : f32
    %18 = vector.broadcast %cst_12 : f32 to vector<8x128xf32>
    %19 = arith.addf %18, %17 : vector<8x128xf32>
    %20 = arith.divf %18, %19 : vector<8x128xf32>
    %c64_i32_13 = arith.constant 64 : i32
    %21 = tpu.dynamic_rotate %14 by %c64_i32_13 dim 1 : vector<8x128xf32>, i32 -> vector<8x128xf32>
    %22 = vector.broadcast %9 : vector<1x128xf32> to vector<8x128xf32>
    %23 = arith.addf %21, %22 : vector<8x128xf32>
    %24 = arith.mulf %20, %23 : vector<8x128xf32>
    %25 = arith.addf %12, %24 : vector<8x128xf32>
    %26 = math.tanh %25 : vector<8x128xf32>
    %c32_i32 = arith.constant 32 : i32
    %27 = tpu.dynamic_rotate %20 by %c32_i32 dim 1 : vector<8x128xf32>, i32 -> vector<8x128xf32>
    %cst_14 = arith.constant 1.000000e+00 : f32
    %28 = vector.broadcast %cst_14 : f32 to vector<8x128xf32>
    %29 = arith.subf %28, %27 : vector<8x128xf32>
    %30 = arith.mulf %29, %26 : vector<8x128xf32>
    %31 = arith.mulf %27, %10 : vector<8x128xf32>
    %32 = arith.addf %30, %31 : vector<8x128xf32>
    %33 = vector.extract_strided_slice %6 {offsets = [8, 0], sizes = [8, 128], strides = [1, 1]} : vector<64x128xf32> to vector<8x128xf32>
    %34 = vector.extract_strided_slice %7 {offsets = [8, 0], sizes = [8, 128], strides = [1, 1]} : vector<64x128xf32> to vector<8x128xf32>
    %35 = arith.truncf %32 : vector<8x128xf32> to vector<8x128xbf16>
    %cst_15 = arith.constant dense<0.000000e+00> : vector<8x128xf32>
    %36 = tpu.matmul %35, %8, %cst_15 {dimension_numbers = #tpu.dot_dimension_numbers<[1], [0], [0], [1], [0, 0, 1, 1], [], []>} : vector<8x128xbf16>, vector<128x128xbf16>, vector<8x128xf32> -> vector<8x128xf32>
    %37 = arith.addf %33, %36 : vector<8x128xf32>
    %38 = arith.negf %37 : vector<8x128xf32>
    %39 = math.exp %38 : vector<8x128xf32>
    %cst_16 = arith.constant 1.000000e+00 : f32
    %40 = vector.broadcast %cst_16 : f32 to vector<8x128xf32>
    %41 = arith.addf %40, %39 : vector<8x128xf32>
    %42 = arith.divf %40, %41 : vector<8x128xf32>
    %c64_i32_17 = arith.constant 64 : i32
    %43 = tpu.dynamic_rotate %36 by %c64_i32_17 dim 1 : vector<8x128xf32>, i32 -> vector<8x128xf32>
    %44 = vector.broadcast %9 : vector<1x128xf32> to vector<8x128xf32>
    %45 = arith.addf %43, %44 : vector<8x128xf32>
    %46 = arith.mulf %42, %45 : vector<8x128xf32>
    %47 = arith.addf %34, %46 : vector<8x128xf32>
    %48 = math.tanh %47 : vector<8x128xf32>
    %c32_i32_18 = arith.constant 32 : i32
    %49 = tpu.dynamic_rotate %42 by %c32_i32_18 dim 1 : vector<8x128xf32>, i32 -> vector<8x128xf32>
    %cst_19 = arith.constant 1.000000e+00 : f32
    %50 = vector.broadcast %cst_19 : f32 to vector<8x128xf32>
    %51 = arith.subf %50, %49 : vector<8x128xf32>
    %52 = arith.mulf %51, %48 : vector<8x128xf32>
    %53 = arith.mulf %49, %32 : vector<8x128xf32>
    %54 = arith.addf %52, %53 : vector<8x128xf32>
    %55 = vector.extract_strided_slice %6 {offsets = [16, 0], sizes = [8, 128], strides = [1, 1]} : vector<64x128xf32> to vector<8x128xf32>
    %56 = vector.extract_strided_slice %7 {offsets = [16, 0], sizes = [8, 128], strides = [1, 1]} : vector<64x128xf32> to vector<8x128xf32>
    %57 = arith.truncf %54 : vector<8x128xf32> to vector<8x128xbf16>
    %cst_20 = arith.constant dense<0.000000e+00> : vector<8x128xf32>
    %58 = tpu.matmul %57, %8, %cst_20 {dimension_numbers = #tpu.dot_dimension_numbers<[1], [0], [0], [1], [0, 0, 1, 1], [], []>} : vector<8x128xbf16>, vector<128x128xbf16>, vector<8x128xf32> -> vector<8x128xf32>
    %59 = arith.addf %55, %58 : vector<8x128xf32>
    %60 = arith.negf %59 : vector<8x128xf32>
    %61 = math.exp %60 : vector<8x128xf32>
    %cst_21 = arith.constant 1.000000e+00 : f32
    %62 = vector.broadcast %cst_21 : f32 to vector<8x128xf32>
    %63 = arith.addf %62, %61 : vector<8x128xf32>
    %64 = arith.divf %62, %63 : vector<8x128xf32>
    %c64_i32_22 = arith.constant 64 : i32
    %65 = tpu.dynamic_rotate %58 by %c64_i32_22 dim 1 : vector<8x128xf32>, i32 -> vector<8x128xf32>
    %66 = vector.broadcast %9 : vector<1x128xf32> to vector<8x128xf32>
    %67 = arith.addf %65, %66 : vector<8x128xf32>
    %68 = arith.mulf %64, %67 : vector<8x128xf32>
    %69 = arith.addf %56, %68 : vector<8x128xf32>
    %70 = math.tanh %69 : vector<8x128xf32>
    %c32_i32_23 = arith.constant 32 : i32
    %71 = tpu.dynamic_rotate %64 by %c32_i32_23 dim 1 : vector<8x128xf32>, i32 -> vector<8x128xf32>
    %cst_24 = arith.constant 1.000000e+00 : f32
    %72 = vector.broadcast %cst_24 : f32 to vector<8x128xf32>
    %73 = arith.subf %72, %71 : vector<8x128xf32>
    %74 = arith.mulf %73, %70 : vector<8x128xf32>
    %75 = arith.mulf %71, %54 : vector<8x128xf32>
    %76 = arith.addf %74, %75 : vector<8x128xf32>
    %77 = vector.extract_strided_slice %6 {offsets = [24, 0], sizes = [8, 128], strides = [1, 1]} : vector<64x128xf32> to vector<8x128xf32>
    %78 = vector.extract_strided_slice %7 {offsets = [24, 0], sizes = [8, 128], strides = [1, 1]} : vector<64x128xf32> to vector<8x128xf32>
    %79 = arith.truncf %76 : vector<8x128xf32> to vector<8x128xbf16>
    %cst_25 = arith.constant dense<0.000000e+00> : vector<8x128xf32>
    %80 = tpu.matmul %79, %8, %cst_25 {dimension_numbers = #tpu.dot_dimension_numbers<[1], [0], [0], [1], [0, 0, 1, 1], [], []>} : vector<8x128xbf16>, vector<128x128xbf16>, vector<8x128xf32> -> vector<8x128xf32>
    %81 = arith.addf %77, %80 : vector<8x128xf32>
    %82 = arith.negf %81 : vector<8x128xf32>
    %83 = math.exp %82 : vector<8x128xf32>
    %cst_26 = arith.constant 1.000000e+00 : f32
    %84 = vector.broadcast %cst_26 : f32 to vector<8x128xf32>
    %85 = arith.addf %84, %83 : vector<8x128xf32>
    %86 = arith.divf %84, %85 : vector<8x128xf32>
    %c64_i32_27 = arith.constant 64 : i32
    %87 = tpu.dynamic_rotate %80 by %c64_i32_27 dim 1 : vector<8x128xf32>, i32 -> vector<8x128xf32>
    %88 = vector.broadcast %9 : vector<1x128xf32> to vector<8x128xf32>
    %89 = arith.addf %87, %88 : vector<8x128xf32>
    %90 = arith.mulf %86, %89 : vector<8x128xf32>
    %91 = arith.addf %78, %90 : vector<8x128xf32>
    %92 = math.tanh %91 : vector<8x128xf32>
    %c32_i32_28 = arith.constant 32 : i32
    %93 = tpu.dynamic_rotate %86 by %c32_i32_28 dim 1 : vector<8x128xf32>, i32 -> vector<8x128xf32>
    %cst_29 = arith.constant 1.000000e+00 : f32
    %94 = vector.broadcast %cst_29 : f32 to vector<8x128xf32>
    %95 = arith.subf %94, %93 : vector<8x128xf32>
    %96 = arith.mulf %95, %92 : vector<8x128xf32>
    %97 = arith.mulf %93, %76 : vector<8x128xf32>
    %98 = arith.addf %96, %97 : vector<8x128xf32>
    %99 = vector.extract_strided_slice %6 {offsets = [32, 0], sizes = [8, 128], strides = [1, 1]} : vector<64x128xf32> to vector<8x128xf32>
    %100 = vector.extract_strided_slice %7 {offsets = [32, 0], sizes = [8, 128], strides = [1, 1]} : vector<64x128xf32> to vector<8x128xf32>
    %101 = arith.truncf %98 : vector<8x128xf32> to vector<8x128xbf16>
    %cst_30 = arith.constant dense<0.000000e+00> : vector<8x128xf32>
    %102 = tpu.matmul %101, %8, %cst_30 {dimension_numbers = #tpu.dot_dimension_numbers<[1], [0], [0], [1], [0, 0, 1, 1], [], []>} : vector<8x128xbf16>, vector<128x128xbf16>, vector<8x128xf32> -> vector<8x128xf32>
    %103 = arith.addf %99, %102 : vector<8x128xf32>
    %104 = arith.negf %103 : vector<8x128xf32>
    %105 = math.exp %104 : vector<8x128xf32>
    %cst_31 = arith.constant 1.000000e+00 : f32
    %106 = vector.broadcast %cst_31 : f32 to vector<8x128xf32>
    %107 = arith.addf %106, %105 : vector<8x128xf32>
    %108 = arith.divf %106, %107 : vector<8x128xf32>
    %c64_i32_32 = arith.constant 64 : i32
    %109 = tpu.dynamic_rotate %102 by %c64_i32_32 dim 1 : vector<8x128xf32>, i32 -> vector<8x128xf32>
    %110 = vector.broadcast %9 : vector<1x128xf32> to vector<8x128xf32>
    %111 = arith.addf %109, %110 : vector<8x128xf32>
    %112 = arith.mulf %108, %111 : vector<8x128xf32>
    %113 = arith.addf %100, %112 : vector<8x128xf32>
    %114 = math.tanh %113 : vector<8x128xf32>
    %c32_i32_33 = arith.constant 32 : i32
    %115 = tpu.dynamic_rotate %108 by %c32_i32_33 dim 1 : vector<8x128xf32>, i32 -> vector<8x128xf32>
    %cst_34 = arith.constant 1.000000e+00 : f32
    %116 = vector.broadcast %cst_34 : f32 to vector<8x128xf32>
    %117 = arith.subf %116, %115 : vector<8x128xf32>
    %118 = arith.mulf %117, %114 : vector<8x128xf32>
    %119 = arith.mulf %115, %98 : vector<8x128xf32>
    %120 = arith.addf %118, %119 : vector<8x128xf32>
    %121 = vector.extract_strided_slice %6 {offsets = [40, 0], sizes = [8, 128], strides = [1, 1]} : vector<64x128xf32> to vector<8x128xf32>
    %122 = vector.extract_strided_slice %7 {offsets = [40, 0], sizes = [8, 128], strides = [1, 1]} : vector<64x128xf32> to vector<8x128xf32>
    %123 = arith.truncf %120 : vector<8x128xf32> to vector<8x128xbf16>
    %cst_35 = arith.constant dense<0.000000e+00> : vector<8x128xf32>
    %124 = tpu.matmul %123, %8, %cst_35 {dimension_numbers = #tpu.dot_dimension_numbers<[1], [0], [0], [1], [0, 0, 1, 1], [], []>} : vector<8x128xbf16>, vector<128x128xbf16>, vector<8x128xf32> -> vector<8x128xf32>
    %125 = arith.addf %121, %124 : vector<8x128xf32>
    %126 = arith.negf %125 : vector<8x128xf32>
    %127 = math.exp %126 : vector<8x128xf32>
    %cst_36 = arith.constant 1.000000e+00 : f32
    %128 = vector.broadcast %cst_36 : f32 to vector<8x128xf32>
    %129 = arith.addf %128, %127 : vector<8x128xf32>
    %130 = arith.divf %128, %129 : vector<8x128xf32>
    %c64_i32_37 = arith.constant 64 : i32
    %131 = tpu.dynamic_rotate %124 by %c64_i32_37 dim 1 : vector<8x128xf32>, i32 -> vector<8x128xf32>
    %132 = vector.broadcast %9 : vector<1x128xf32> to vector<8x128xf32>
    %133 = arith.addf %131, %132 : vector<8x128xf32>
    %134 = arith.mulf %130, %133 : vector<8x128xf32>
    %135 = arith.addf %122, %134 : vector<8x128xf32>
    %136 = math.tanh %135 : vector<8x128xf32>
    %c32_i32_38 = arith.constant 32 : i32
    %137 = tpu.dynamic_rotate %130 by %c32_i32_38 dim 1 : vector<8x128xf32>, i32 -> vector<8x128xf32>
    %cst_39 = arith.constant 1.000000e+00 : f32
    %138 = vector.broadcast %cst_39 : f32 to vector<8x128xf32>
    %139 = arith.subf %138, %137 : vector<8x128xf32>
    %140 = arith.mulf %139, %136 : vector<8x128xf32>
    %141 = arith.mulf %137, %120 : vector<8x128xf32>
    %142 = arith.addf %140, %141 : vector<8x128xf32>
    %143 = vector.extract_strided_slice %6 {offsets = [48, 0], sizes = [8, 128], strides = [1, 1]} : vector<64x128xf32> to vector<8x128xf32>
    %144 = vector.extract_strided_slice %7 {offsets = [48, 0], sizes = [8, 128], strides = [1, 1]} : vector<64x128xf32> to vector<8x128xf32>
    %145 = arith.truncf %142 : vector<8x128xf32> to vector<8x128xbf16>
    %cst_40 = arith.constant dense<0.000000e+00> : vector<8x128xf32>
    %146 = tpu.matmul %145, %8, %cst_40 {dimension_numbers = #tpu.dot_dimension_numbers<[1], [0], [0], [1], [0, 0, 1, 1], [], []>} : vector<8x128xbf16>, vector<128x128xbf16>, vector<8x128xf32> -> vector<8x128xf32>
    %147 = arith.addf %143, %146 : vector<8x128xf32>
    %148 = arith.negf %147 : vector<8x128xf32>
    %149 = math.exp %148 : vector<8x128xf32>
    %cst_41 = arith.constant 1.000000e+00 : f32
    %150 = vector.broadcast %cst_41 : f32 to vector<8x128xf32>
    %151 = arith.addf %150, %149 : vector<8x128xf32>
    %152 = arith.divf %150, %151 : vector<8x128xf32>
    %c64_i32_42 = arith.constant 64 : i32
    %153 = tpu.dynamic_rotate %146 by %c64_i32_42 dim 1 : vector<8x128xf32>, i32 -> vector<8x128xf32>
    %154 = vector.broadcast %9 : vector<1x128xf32> to vector<8x128xf32>
    %155 = arith.addf %153, %154 : vector<8x128xf32>
    %156 = arith.mulf %152, %155 : vector<8x128xf32>
    %157 = arith.addf %144, %156 : vector<8x128xf32>
    %158 = math.tanh %157 : vector<8x128xf32>
    %c32_i32_43 = arith.constant 32 : i32
    %159 = tpu.dynamic_rotate %152 by %c32_i32_43 dim 1 : vector<8x128xf32>, i32 -> vector<8x128xf32>
    %cst_44 = arith.constant 1.000000e+00 : f32
    %160 = vector.broadcast %cst_44 : f32 to vector<8x128xf32>
    %161 = arith.subf %160, %159 : vector<8x128xf32>
    %162 = arith.mulf %161, %158 : vector<8x128xf32>
    %163 = arith.mulf %159, %142 : vector<8x128xf32>
    %164 = arith.addf %162, %163 : vector<8x128xf32>
    %165 = vector.extract_strided_slice %6 {offsets = [56, 0], sizes = [8, 128], strides = [1, 1]} : vector<64x128xf32> to vector<8x128xf32>
    %166 = vector.extract_strided_slice %7 {offsets = [56, 0], sizes = [8, 128], strides = [1, 1]} : vector<64x128xf32> to vector<8x128xf32>
    %167 = arith.truncf %164 : vector<8x128xf32> to vector<8x128xbf16>
    %cst_45 = arith.constant dense<0.000000e+00> : vector<8x128xf32>
    %168 = tpu.matmul %167, %8, %cst_45 {dimension_numbers = #tpu.dot_dimension_numbers<[1], [0], [0], [1], [0, 0, 1, 1], [], []>} : vector<8x128xbf16>, vector<128x128xbf16>, vector<8x128xf32> -> vector<8x128xf32>
    %169 = arith.addf %165, %168 : vector<8x128xf32>
    %170 = arith.negf %169 : vector<8x128xf32>
    %171 = math.exp %170 : vector<8x128xf32>
    %cst_46 = arith.constant 1.000000e+00 : f32
    %172 = vector.broadcast %cst_46 : f32 to vector<8x128xf32>
    %173 = arith.addf %172, %171 : vector<8x128xf32>
    %174 = arith.divf %172, %173 : vector<8x128xf32>
    %c64_i32_47 = arith.constant 64 : i32
    %175 = tpu.dynamic_rotate %168 by %c64_i32_47 dim 1 : vector<8x128xf32>, i32 -> vector<8x128xf32>
    %176 = vector.broadcast %9 : vector<1x128xf32> to vector<8x128xf32>
    %177 = arith.addf %175, %176 : vector<8x128xf32>
    %178 = arith.mulf %174, %177 : vector<8x128xf32>
    %179 = arith.addf %166, %178 : vector<8x128xf32>
    %180 = math.tanh %179 : vector<8x128xf32>
    %c32_i32_48 = arith.constant 32 : i32
    %181 = tpu.dynamic_rotate %174 by %c32_i32_48 dim 1 : vector<8x128xf32>, i32 -> vector<8x128xf32>
    %cst_49 = arith.constant 1.000000e+00 : f32
    %182 = vector.broadcast %cst_49 : f32 to vector<8x128xf32>
    %183 = arith.subf %182, %181 : vector<8x128xf32>
    %184 = arith.mulf %183, %180 : vector<8x128xf32>
    %185 = arith.mulf %181, %164 : vector<8x128xf32>
    %186 = arith.addf %184, %185 : vector<8x128xf32>
    %c0_50 = arith.constant 0 : index
    %c0_51 = arith.constant 0 : index
    %187 = vector.load %arg20[%c0_50, %c0_51] : memref<8x128xf32, #tpu.memory_space<vmem>>, vector<8x128xf32>
    tpu.vector_store %arg20[%c0_50, %c0_51], %186 {strides = array<i32>} : memref<8x128xf32, #tpu.memory_space<vmem>>, vector<8x128xf32>,
    %188 = tpu.concatenate %32, %54, %76, %98, %120, %142, %164, %186 in 0 : vector<8x128xf32>, vector<8x128xf32>, vector<8x128xf32>, vector<8x128xf32>, vector<8x128xf32>, vector<8x128xf32>, vector<8x128xf32>, vector<8x128xf32> -> vector<64x128xf32>
    %c0_52 = arith.constant 0 : index
    %c0_53 = arith.constant 0 : index
    %189 = vector.load %arg1[%c0_52, %c0_53] : memref<8x32xf32, #tpu.memory_space<vmem>>, vector<8x32xf32>
    %190 = arith.truncf %188 : vector<64x128xf32> to vector<64x128xbf16>
    %c0_54 = arith.constant 0 : index
    %c0_55 = arith.constant 0 : index
    %191 = vector.load %arg7[%c0_54, %c0_55] : memref<128x32xbf16, #tpu.memory_space<vmem>>, vector<128x32xbf16>
    %cst_56 = arith.constant dense<0.000000e+00> : vector<64x32xf32>
    %192 = tpu.matmul %190, %191, %cst_56 {dimension_numbers = #tpu.dot_dimension_numbers<[1], [0], [0], [1], [0, 0, 1, 1], [], []>} : vector<64x128xbf16>, vector<128x32xbf16>, vector<64x32xf32> -> vector<64x32xf32>
    %c0_57 = arith.constant 0 : index
    %c0_58 = arith.constant 0 : index
    %193 = vector.load %arg8[%c0_57, %c0_58] : memref<1x32xf32, #tpu.memory_space<vmem>>, vector<1x32xf32>
    %194 = vector.broadcast %193 : vector<1x32xf32> to vector<64x32xf32>
    %195 = arith.addf %192, %194 : vector<64x32xf32>
    %196 = arith.truncf %189 : vector<8x32xf32> to vector<8x32xbf16>
    %c0_59 = arith.constant 0 : index
    %c0_60 = arith.constant 0 : index
    %197 = vector.load %arg9[%c0_59, %c0_60] : memref<32x32xbf16, #tpu.memory_space<vmem>>, vector<32x32xbf16>
    %cst_61 = arith.constant dense<0.000000e+00> : vector<8x32xf32>
    %198 = tpu.matmul %196, %197, %cst_61 {dimension_numbers = #tpu.dot_dimension_numbers<[1], [0], [0], [1], [0, 0, 1, 1], [], []>} : vector<8x32xbf16>, vector<32x32xbf16>, vector<8x32xf32> -> vector<8x32xf32>
    %c0_62 = arith.constant 0 : index
    %c0_63 = arith.constant 0 : index
    %199 = vector.load %arg10[%c0_62, %c0_63] : memref<1x32xf32, #tpu.memory_space<vmem>>, vector<1x32xf32>
    %200 = vector.broadcast %199 : vector<1x32xf32> to vector<8x32xf32>
    %201 = arith.addf %198, %200 : vector<8x32xf32>
    %202 = vector.shape_cast %195 : vector<64x32xf32> to vector<8x8x32xf32>
    %203 = vector.shape_cast %201 : vector<8x32xf32> to vector<1x8x32xf32>
    %204 = vector.broadcast %203 : vector<1x8x32xf32> to vector<8x8x32xf32>
    %205 = arith.addf %202, %204 : vector<8x8x32xf32>
    %cst_64 = arith.constant 0.000000e+00 : f32
    %206 = vector.broadcast %cst_64 : f32 to vector<8x8x32xf32>
    %207 = arith.maximumf %205, %206 : vector<8x8x32xf32>
    %c0_65 = arith.constant 0 : index
    %c0_66 = arith.constant 0 : index
    %208 = vector.load %arg11[%c0_65, %c0_66] : memref<1x32xf32, #tpu.memory_space<vmem>>, vector<1x32xf32>
    %209 = vector.shape_cast %208 : vector<1x32xf32> to vector<1x1x32xf32>
    %210 = vector.broadcast %209 : vector<1x1x32xf32> to vector<8x8x32xf32>
    %211 = arith.mulf %207, %210 : vector<8x8x32xf32>
    %cst_67 = arith.constant dense<0.000000e+00> : vector<8x8xf32>
    %212 = vector.multi_reduction <add>, %211, %cst_67 [2] : vector<8x8x32xf32> to vector<8x8xf32>
    %213 = vector.shape_cast %212 : vector<8x8xf32> to vector<8x8x1xf32>
    %cst_68 = arith.constant dense<0xFF800000> : vector<8x1xf32>
    %214 = vector.multi_reduction <maximumf>, %213, %cst_68 [0] : vector<8x8x1xf32> to vector<8x1xf32>
    %215 = vector.shape_cast %214 : vector<8x1xf32> to vector<1x8x1xf32>
    %216 = vector.broadcast %215 : vector<1x8x1xf32> to vector<8x8x1xf32>
    %217 = arith.subf %213, %216 : vector<8x8x1xf32>
    %218 = math.exp %217 : vector<8x8x1xf32>
    %cst_69 = arith.constant dense<0.000000e+00> : vector<8x1xf32>
    %219 = vector.multi_reduction <add>, %218, %cst_69 [0] : vector<8x8x1xf32> to vector<8x1xf32>
    %220 = vector.shape_cast %219 : vector<8x1xf32> to vector<1x8x1xf32>
    %221 = tpu.reciprocal %220 {approx = true} : vector<1x8x1xf32> -> vector<1x8x1xf32>
    %222 = vector.broadcast %221 : vector<1x8x1xf32> to vector<8x8x1xf32>
    %223 = arith.mulf %218, %222 : vector<8x8x1xf32>
    %c0_70 = arith.constant 0 : index
    %c0_71 = arith.constant 0 : index
    %c0_72 = arith.constant 0 : index
    %224 = vector.load %arg21[%c0_70, %c0_71, %c0_72] : memref<8x8x1xf32, #tpu.memory_space<vmem>>, vector<8x8x1xf32>
    tpu.vector_store %arg21[%c0_70, %c0_71, %c0_72], %223 {strides = array<i32>} : memref<8x8x1xf32, #tpu.memory_space<vmem>>, vector<8x8x1xf32>,
    %225 = vector.shape_cast %188 : vector<64x128xf32> to vector<8x8x128xf32>
    %226 = vector.broadcast %223 : vector<8x8x1xf32> to vector<8x8x128xf32>
    %227 = arith.mulf %226, %225 : vector<8x8x128xf32>
    %cst_73 = arith.constant dense<0.000000e+00> : vector<8x128xf32>
    %228 = vector.multi_reduction <add>, %227, %cst_73 [0] : vector<8x8x128xf32> to vector<8x128xf32>
    %229 = arith.truncf %228 : vector<8x128xf32> to vector<8x128xbf16>
    %c0_74 = arith.constant 0 : index
    %c0_75 = arith.constant 0 : index
    %230 = vector.load %arg12[%c0_74, %c0_75] : memref<128x128xbf16, #tpu.memory_space<vmem>>, vector<128x128xbf16>
    %cst_76 = arith.constant dense<0.000000e+00> : vector<8x128xf32>
    %231 = tpu.matmul %229, %230, %cst_76 {dimension_numbers = #tpu.dot_dimension_numbers<[1], [0], [0], [1], [0, 0, 1, 1], [], []>} : vector<8x128xbf16>, vector<128x128xbf16>, vector<8x128xf32> -> vector<8x128xf32>
    %232 = arith.truncf %189 : vector<8x32xf32> to vector<8x32xbf16>
    %c0_77 = arith.constant 0 : index
    %c0_78 = arith.constant 0 : index
    %233 = vector.load %arg13[%c0_77, %c0_78] : memref<32x128xbf16, #tpu.memory_space<vmem>>, vector<32x128xbf16>
    %cst_79 = arith.constant dense<0.000000e+00> : vector<8x128xf32>
    %234 = tpu.matmul %232, %233, %cst_79 {dimension_numbers = #tpu.dot_dimension_numbers<[1], [0], [0], [1], [0, 0, 1, 1], [], []>} : vector<8x32xbf16>, vector<32x128xbf16>, vector<8x128xf32> -> vector<8x128xf32>
    %235 = arith.addf %231, %234 : vector<8x128xf32>
    %c0_80 = arith.constant 0 : index
    %c0_81 = arith.constant 0 : index
    %236 = vector.load %arg14[%c0_80, %c0_81] : memref<1x128xf32, #tpu.memory_space<vmem>>, vector<1x128xf32>
    %237 = vector.broadcast %236 : vector<1x128xf32> to vector<8x128xf32>
    %238 = arith.addf %235, %237 : vector<8x128xf32>
    %239 = arith.truncf %238 : vector<8x128xf32> to vector<8x128xbf16>
    %c0_82 = arith.constant 0 : index
    %c0_83 = arith.constant 0 : index
    %240 = vector.load %arg15[%c0_82, %c0_83] : memref<128x64xbf16, #tpu.memory_space<vmem>>, vector<128x64xbf16>
    %cst_84 = arith.constant dense<0.000000e+00> : vector<8x64xf32>
    %241 = tpu.matmul %239, %240, %cst_84 {dimension_numbers = #tpu.dot_dimension_numbers<[1], [0], [0], [1], [0, 0, 1, 1], [], []>} : vector<8x128xbf16>, vector<128x64xbf16>, vector<8x64xf32> -> vector<8x64xf32>
    %c0_85 = arith.constant 0 : index
    %c0_86 = arith.constant 0 : index
    %242 = vector.load %arg16[%c0_85, %c0_86] : memref<1x64xf32, #tpu.memory_space<vmem>>, vector<1x64xf32>
    %243 = vector.broadcast %242 : vector<1x64xf32> to vector<8x64xf32>
    %244 = arith.addf %241, %243 : vector<8x64xf32>
    %c0_87 = arith.constant 0 : index
    %c0_88 = arith.constant 0 : index
    %245 = vector.load %arg17[%c0_87, %c0_88] : memref<1x64xf32, #tpu.memory_space<vmem>>, vector<1x64xf32>
    %246 = vector.broadcast %245 : vector<1x64xf32> to vector<8x64xf32>
    %247 = arith.mulf %244, %246 : vector<8x64xf32>
    %cst_89 = arith.constant dense<0.000000e+00> : vector<8xf32>
    %248 = vector.multi_reduction <add>, %247, %cst_89 [1] : vector<8x64xf32> to vector<8xf32>
    %249 = vector.shape_cast %248 : vector<8xf32> to vector<8x1xf32>
    %c0_90 = arith.constant 0 : index
    %250 = memref.load %arg18[%c0_90] : memref<1xf32, #tpu.memory_space<smem>>
    %251 = vector.broadcast %250 : f32 to vector<8x1xf32>
    %252 = arith.addf %249, %251 : vector<8x1xf32>
    %253 = arith.negf %252 : vector<8x1xf32>
    %254 = math.exp %253 : vector<8x1xf32>
    %cst_91 = arith.constant 1.000000e+00 : f32
    %255 = vector.broadcast %cst_91 : f32 to vector<8x1xf32>
    %256 = arith.addf %255, %254 : vector<8x1xf32>
    %257 = arith.divf %255, %256 : vector<8x1xf32>
    %c0_92 = arith.constant 0 : index
    %c0_93 = arith.constant 0 : index
    %258 = vector.load %arg19[%c0_92, %c0_93] : memref<8x1xf32, #tpu.memory_space<vmem>>, vector<8x1xf32>
    tpu.vector_store %arg19[%c0_92, %c0_93], %257 {strides = array<i32>} : memref<8x1xf32, #tpu.memory_space<vmem>>, vector<8x1xf32>,
    return
  }
}

</mosaic_0001>

<llo_original>
// kernel: tpu_custom_call.1
$region0: #{tpu_custom_call.1}
  #allocation0 [shape = 'u32[]', space=smem, size = 0x4, offset = 0x4, fixed_abs, tag = 'smem constant byte address 0x4 - core index']
  #allocation1 [shape = 'u32[144,128]{1,0:T(1,128)}', space=vmem, size = 0x12000, scoped, tag = 'internal scratch']
  #allocation2 [shape = 'f32[1]{0:T(128)S(6)}', space=smem, size = 0x200, scoped, tag = 'scoped memory for tpu_custom_call.1']
  %s0 = inlined_call_operand.vmem [shape: f32[64,32], index: 0, kind: input, shape index: {}]
  %s1 = inlined_call_operand.vmem [shape: f32[8,32], index: 1, kind: input, shape index: {}]
  %s2 = inlined_call_operand.vmem [shape: f32[8,128], index: 2, kind: input, shape index: {}]
  %s3 = inlined_call_operand.vmem [shape: bf16[32,128], index: 3, kind: input, shape index: {}]
  %s4 = inlined_call_operand.vmem [shape: bf16[128,128], index: 4, kind: input, shape index: {}]
  %s5 = inlined_call_operand.vmem [shape: f32[1,128], index: 5, kind: input, shape index: {}]
  %s6 = inlined_call_operand.vmem [shape: f32[1,128], index: 6, kind: input, shape index: {}]
  %s7 = inlined_call_operand.vmem [shape: bf16[128,32], index: 7, kind: input, shape index: {}]
  %s8 = inlined_call_operand.vmem [shape: f32[1,32], index: 8, kind: input, shape index: {}]
  %s9 = inlined_call_operand.vmem [shape: bf16[32,32], index: 9, kind: input, shape index: {}]
  %s10 = inlined_call_operand.vmem [shape: f32[1,32], index: 10, kind: input, shape index: {}]
  %s11 = inlined_call_operand.vmem [shape: f32[1,32], index: 11, kind: input, shape index: {}]
  %s12 = inlined_call_operand.vmem [shape: bf16[128,128], index: 12, kind: input, shape index: {}]
  %s13 = inlined_call_operand.vmem [shape: bf16[32,128], index: 13, kind: input, shape index: {}]
  %s14 = inlined_call_operand.vmem [shape: f32[1,128], index: 14, kind: input, shape index: {}]
  %s15 = inlined_call_operand.vmem [shape: bf16[128,64], index: 15, kind: input, shape index: {}]
  %s16 = inlined_call_operand.vmem [shape: f32[1,64], index: 16, kind: input, shape index: {}]
  %s17 = inlined_call_operand.vmem [shape: f32[1,64], index: 17, kind: input, shape index: {}]
  %s18 = inlined_call_operand.<no memory space> [shape: f32[1], index: 18, kind: input, shape index: {}]
  %s19 = inlined_call_operand.vmem [shape: f32[8,1], index: 19, kind: output, shape index: {0}]
  %s20 = inlined_call_operand.hbm [shape: f32[8,128], index: 20, kind: output, shape index: {1}]
  %s21 = inlined_call_operand.vmem [shape: f32[8,8,1], index: 21, kind: output, shape index: {2}]
  %22 = xla_tuple %s19, %s20, %s21
  %s23 = sld [smem:[#allocation0]]
  $region102: #{tpu_custom_call.1} parent=0
    _
  %s25 = ssub.s32 1, %s23
  %s26 = scalar_select 0, %s25, %s23
  %27 = sst [smem:[#allocation2]] %s18
  $region1: #{tpu_custom_call.1} parent=0
    #allocation3 [shape = 'u8[4096]{0}', space=vmem, size = 0x1000, scoped, tag = 'output window, operand 1, single buffered']
    #allocation4 [shape = 's32[1]{0}', space=sflag, size = 0x4, scoped, tag = 'scoped memory for tpu_custom_call.1']
    %28 = vsyncpa [#allocation4], 0
    // Predicated region
    $region2: #{tpu_custom_call.1} parent=1 // pred_check
      _
    $region3: #{tpu_custom_call.1} parent=1 // pred_check_branch
      %30 = sbr.rel (0) target = $region5
    $region4: #{tpu_custom_call.1} parent=1 // pred_region
      _
    $region5: #{tpu_custom_call.1} parent=1 // pred_fallthru
      _
    // Predicated region
    $region6: #{tpu_custom_call.1} parent=1 // pred_check
      _
    $region7: #{tpu_custom_call.1} parent=1 // pred_check_branch
      %32 = sbr.rel (0) target = $region9
    $region8: #{tpu_custom_call.1} parent=1 // pred_region
      _
    $region9: #{tpu_custom_call.1} parent=1 // pred_fallthru
      _
    // Predicated region
    $region10: #{tpu_custom_call.1} parent=1 // pred_check
      _
    $region11: #{tpu_custom_call.1} parent=1 // pred_check_branch
      %34 = sbr.rel (0) target = $region13
    $region12: #{tpu_custom_call.1} parent=1 // pred_region
      _
    $region13: #{tpu_custom_call.1} parent=1 // pred_fallthru
      _
    // Predicated region
    $region14: #{tpu_custom_call.1} parent=1 // pred_check
      _
    $region15: #{tpu_custom_call.1} parent=1 // pred_check_branch
      %36 = sbr.rel (0) target = $region17
    $region16: #{tpu_custom_call.1} parent=1 // pred_region
      _
    $region17: #{tpu_custom_call.1} parent=1 // pred_fallthru
      _
    // Predicated region
    $region18: #{tpu_custom_call.1} parent=1 // pred_check
      _
    $region19: #{tpu_custom_call.1} parent=1 // pred_check_branch
      %38 = sbr.rel (0) target = $region21
    $region20: #{tpu_custom_call.1} parent=1 // pred_region
      _
    $region21: #{tpu_custom_call.1} parent=1 // pred_fallthru
      _
    // Predicated region
    $region22: #{tpu_custom_call.1} parent=1 // pred_check
      _
    $region23: #{tpu_custom_call.1} parent=1 // pred_check_branch
      %40 = sbr.rel (0) target = $region25
    $region24: #{tpu_custom_call.1} parent=1 // pred_region
      _
    $region25: #{tpu_custom_call.1} parent=1 // pred_fallthru
      _
    // Predicated region
    $region26: #{tpu_custom_call.1} parent=1 // pred_check
      _
    $region27: #{tpu_custom_call.1} parent=1 // pred_check_branch
      %42 = sbr.rel (0) target = $region29
    $region28: #{tpu_custom_call.1} parent=1 // pred_region
      _
    $region29: #{tpu_custom_call.1} parent=1 // pred_fallthru
      _
    // Predicated region
    $region30: #{tpu_custom_call.1} parent=1 // pred_check
      _
    $region31: #{tpu_custom_call.1} parent=1 // pred_check_branch
      %44 = sbr.rel (0) target = $region33
    $region32: #{tpu_custom_call.1} parent=1 // pred_region
      _
    $region33: #{tpu_custom_call.1} parent=1 // pred_fallthru
      _
    // Predicated region
    $region34: #{tpu_custom_call.1} parent=1 // pred_check
      _
    $region35: #{tpu_custom_call.1} parent=1 // pred_check_branch
      %46 = sbr.rel (0) target = $region37
    $region36: #{tpu_custom_call.1} parent=1 // pred_region
      _
    $region37: #{tpu_custom_call.1} parent=1 // pred_fallthru
      _
    // Predicated region
    $region38: #{tpu_custom_call.1} parent=1 // pred_check
      _
    $region39: #{tpu_custom_call.1} parent=1 // pred_check_branch
      %48 = sbr.rel (0) target = $region41
    $region40: #{tpu_custom_call.1} parent=1 // pred_region
      _
    $region41: #{tpu_custom_call.1} parent=1 // pred_fallthru
      _
    // Predicated region
    $region42: #{tpu_custom_call.1} parent=1 // pred_check
      _
    $region43: #{tpu_custom_call.1} parent=1 // pred_check_branch
      %50 = sbr.rel (0) target = $region45
    $region44: #{tpu_custom_call.1} parent=1 // pred_region
      _
    $region45: #{tpu_custom_call.1} parent=1 // pred_fallthru
      _
    // Predicated region
    $region46: #{tpu_custom_call.1} parent=1 // pred_check
      _
    $region47: #{tpu_custom_call.1} parent=1 // pred_check_branch
      %52 = sbr.rel (0) target = $region49
    $region48: #{tpu_custom_call.1} parent=1 // pred_region
      _
    $region49: #{tpu_custom_call.1} parent=1 // pred_fallthru
      _
    // Predicated region
    $region50: #{tpu_custom_call.1} parent=1 // pred_check
      _
    $region51: #{tpu_custom_call.1} parent=1 // pred_check_branch
      %54 = sbr.rel (0) target = $region53
    $region52: #{tpu_custom_call.1} parent=1 // pred_region
      _
    $region53: #{tpu_custom_call.1} parent=1 // pred_fallthru
      _
    // Predicated region
    $region54: #{tpu_custom_call.1} parent=1 // pred_check
      _
    $region55: #{tpu_custom_call.1} parent=1 // pred_check_branch
      %56 = sbr.rel (0) target = $region57
    $region56: #{tpu_custom_call.1} parent=1 // pred_region
      _
    $region57: #{tpu_custom_call.1} parent=1 // pred_fallthru
      _
    // Predicated region
    $region58: #{tpu_custom_call.1} parent=1 // pred_check
      _
    $region59: #{tpu_custom_call.1} parent=1 // pred_check_branch
      %58 = sbr.rel (0) target = $region61
    $region60: #{tpu_custom_call.1} parent=1 // pred_region
      _
    $region61: #{tpu_custom_call.1} parent=1 // pred_fallthru
      _
    // Predicated region
    $region62: #{tpu_custom_call.1} parent=1 // pred_check
      _
    $region63: #{tpu_custom_call.1} parent=1 // pred_check_branch
      %60 = sbr.rel (0) target = $region65
    $region64: #{tpu_custom_call.1} parent=1 // pred_region
      _
    $region65: #{tpu_custom_call.1} parent=1 // pred_fallthru
      _
    // Predicated region
    $region66: #{tpu_custom_call.1} parent=1 // pred_check
      _
    $region67: #{tpu_custom_call.1} parent=1 // pred_check_branch
      %62 = sbr.rel (0) target = $region69
    $region68: #{tpu_custom_call.1} parent=1 // pred_region
      _
    $region69: #{tpu_custom_call.1} parent=1 // pred_fallthru
      _
    // Predicated region
    $region70: #{tpu_custom_call.1} parent=1 // pred_check
      _
    $region71: #{tpu_custom_call.1} parent=1 // pred_check_branch
      %64 = sbr.rel (0) target = $region73
    $region72: #{tpu_custom_call.1} parent=1 // pred_region
      _
    $region73: #{tpu_custom_call.1} parent=1 // pred_fallthru
      _
    // Predicated region
    $region74: #{tpu_custom_call.1} parent=1 // pred_check
      _
    $region75: #{tpu_custom_call.1} parent=1 // pred_check_branch
      %66 = sbr.rel (0) target = $region77
    $region76: #{tpu_custom_call.1} parent=1 // pred_region
      _
    $region77: #{tpu_custom_call.1} parent=1 // pred_fallthru
      _
    %v68 = vld [vmem:[%s0] sm:$0xff]
    %v69 = vld [vmem:[%s0 + $0x8] sm:$0xff]
    %v70 = vld [vmem:[%s0 + $0x10] sm:$0xff]
    %v71 = vld [vmem:[%s0 + $0x18] sm:$0xff]
    %v72 = vld [vmem:[%s0 + $0x20] sm:$0xff]
    %v73 = vld [vmem:[%s0 + $0x28] sm:$0xff]
    %v74 = vld [vmem:[%s0 + $0x30] sm:$0xff]
    %v75 = vld [vmem:[%s0 + $0x38] sm:$0xff]
    %v76 = vpack.c.bf16 %v69, %v68
    %v77 = vpack.c.bf16 %v71, %v70
    %v78 = vpack.c.bf16 %v73, %v72
    %v79 = vpack.c.bf16 %v75, %v74
    %v80 = vld [vmem:[%s3] sm:$0xf]
    %v81 = vld [vmem:[%s3 + $0x4] sm:$0xf]
    %v82 = vld [vmem:[%s3 + $0x8] sm:$0xf]
    %v83 = vld [vmem:[%s3 + $0xc] sm:$0xf]
    %v84 = vld [vmem:[%s5] sm:$0x1]
    %v86 = vlaneseq
    %v87 = vshrl.u32 %v86, 7
    %v88 = vsub.s32 0, %v87
    %v89 = vrot.slane %v84, %v88
    %v95 = vunpack.c.l.b16 %v80
    %v96 = vunpack.c.l.b16 %v81
    %v97 = vunpack.c.l.b16 %v82
    %v98 = vunpack.c.l.b16 %v83
    %v99 = vpack.c.b16 %v96, %v95
    %v100 = vpack.c.b16 %v98, %v97
    %vm103 = vcmask 261120
    %v105 = vsel %vm103, %v76, 0
    %v108 = vsel %vm103, %v77, 0
    %v111 = vsel %vm103, %v78, 0
    %v114 = vsel %vm103, %v79, 0
    %116 = vmatprep.subr.bf16.mxu0 0
    %117 = vmatpush1.bf16.msra.mxu0 %v99
    %118 = vmatprep.subr.bf16.mxu0 0
    %119 = vmatpush1.bf16.msra.mxu0 %v100
    %120 = vmatprep.subr.bf16.mxu0 0
    %121 = vmatpush1.bf16.msra.mxu0 0
    %122 = vmatprep.subr.bf16.mxu0 0
    %123 = vmatpush1.bf16.msra.mxu0 0
    %124 = vmatprep.subr.bf16.mxu0 0
    %125 = vmatpush1.bf16.msra.mxu0 0
    %126 = vmatprep.subr.bf16.mxu0 0
    %127 = vmatpush1.bf16.msra.mxu0 0
    %128 = vmatprep.subr.bf16.mxu0 0
    %129 = vmatpush1.bf16.msra.mxu0 0
    %130 = vmatprep.subr.bf16.mxu0 0
    %131 = vmatpush1.bf16.msra.mxu0 0
    %132 = vmatprep.subr.bf16.mxu0 0
    %133 = vmatpush1.bf16.msra.mxu0 0
    %134 = vmatprep.subr.bf16.mxu0 0
    %135 = vmatpush1.bf16.msra.mxu0 0
    %136 = vmatprep.subr.bf16.mxu0 0
    %137 = vmatpush1.bf16.msra.mxu0 0
    %138 = vmatprep.subr.bf16.mxu0 0
    %139 = vmatpush1.bf16.msra.mxu0 0
    %140 = vmatprep.subr.bf16.mxu0 0
    %141 = vmatpush1.bf16.msra.mxu0 0
    %142 = vmatprep.subr.bf16.mxu0 0
    %143 = vmatpush1.bf16.msra.mxu0 0
    %144 = vmatprep.subr.bf16.mxu0 0
    %145 = vmatpush1.bf16.msra.mxu0 0
    %146 = vmatprep.subr.bf16.mxu0 0
    %147 = vmatpush1.bf16.msra.mxu0 0
    %148 = vmatprep.mubr.bf16.mxu0 0
    %149 = vmatmul.mubr.bf16.gmra.mrb[0].mxu0 %v105
    %v150 = vpop.f32.mrb[0].mxu0
    %v151 = vadd.f32 %v89, %v150
    %v152 = vpop.f32.mrb[0].mxu0
    %v153 = vpop.f32.mrb[0].mxu0
    %v154 = vadd.f32 %v89, %v153
    %v155 = vpop.f32.mrb[0].mxu0
    %156 = vmatprep.mubr.bf16.mxu0 0
    %157 = vmatmul.mubr.bf16.gmra.mrb[0].mxu0 %v108
    %v158 = vpop.f32.mrb[0].mxu0
    %v159 = vadd.f32 %v89, %v158
    %v160 = vpop.f32.mrb[0].mxu0
    %v161 = vpop.f32.mrb[0].mxu0
    %v162 = vadd.f32 %v89, %v161
    %v163 = vpop.f32.mrb[0].mxu0
    %164 = vmatprep.mubr.bf16.mxu0 0
    %165 = vmatmul.mubr.bf16.gmra.mrb[0].mxu0 %v111
    %v166 = vpop.f32.mrb[0].mxu0
    %v167 = vadd.f32 %v89, %v166
    %v168 = vpop.f32.mrb[0].mxu0
    %v169 = vpop.f32.mrb[0].mxu0
    %v170 = vadd.f32 %v89, %v169
    %v171 = vpop.f32.mrb[0].mxu0
    %172 = vmatprep.mubr.bf16.mxu0 0
    %173 = vmatmul.mubr.bf16.gmra.mrb[0].mxu0 %v114
    %v174 = vpop.f32.mrb[0].mxu0
    %v175 = vadd.f32 %v89, %v174
    %v176 = vpop.f32.mrb[0].mxu0
    %v177 = vpop.f32.mrb[0].mxu0
    %v178 = vadd.f32 %v89, %v177
    %v179 = vpop.f32.mrb[0].mxu0
    %180 = vdwg.mxu0
    %181 = vrot.lane.b32.xlu0 %v151, 64
    %v182 = vpop.permute.xlu0 %181
    %183 = vrot.lane.b32.xlu0 %v154, 64
    %v184 = vpop.permute.xlu0 %183
    %185 = vrot.lane.b32.xlu0 %v159, 64
    %v186 = vpop.permute.xlu0 %185
    %187 = vrot.lane.b32.xlu0 %v162, 64
    %v188 = vpop.permute.xlu0 %187
    %189 = vrot.lane.b32.xlu0 %v167, 64
    %v190 = vpop.permute.xlu0 %189
    %191 = vrot.lane.b32.xlu0 %v170, 64
    %v192 = vpop.permute.xlu0 %191
    %193 = vrot.lane.b32.xlu0 %v175, 64
    %v194 = vpop.permute.xlu0 %193
    %195 = vrot.lane.b32.xlu0 %v178, 64
    %v196 = vpop.permute.xlu0 %195
    %v197 = vld [vmem:[%s4] sm:$0xf]
    %v198 = vld [vmem:[%s4 + $0x4] sm:$0xf]
    %v199 = vld [vmem:[%s4 + $0x8] sm:$0xf]
    %v200 = vld [vmem:[%s4 + $0xc] sm:$0xf]
    %v201 = vld [vmem:[%s4 + $0x10] sm:$0xf]
    %v202 = vld [vmem:[%s4 + $0x14] sm:$0xf]
    %v203 = vld [vmem:[%s4 + $0x18] sm:$0xf]
    %v204 = vld [vmem:[%s4 + $0x1c] sm:$0xf]
    %v205 = vld [vmem:[%s4 + $0x20] sm:$0xf]
    %v206 = vld [vmem:[%s4 + $0x24] sm:$0xf]
    %v207 = vld [vmem:[%s4 + $0x28] sm:$0xf]
    %v208 = vld [vmem:[%s4 + $0x2c] sm:$0xf]
    %v209 = vld [vmem:[%s4 + $0x30] sm:$0xf]
    %v210 = vld [vmem:[%s4 + $0x34] sm:$0xf]
    %v211 = vld [vmem:[%s4 + $0x38] sm:$0xf]
    %v212 = vld [vmem:[%s4 + $0x3c] sm:$0xf]
    %v213 = vld [vmem:[%s6] sm:$0x1]
    %v214 = vld [vmem:[%s2] sm:$0xff]
    %v215 = vpack.c.bf16 %v214, %v214
    %v232 = vunpack.c.l.b16 %v197
    %v233 = vunpack.c.l.b16 %v198
    %v234 = vunpack.c.l.b16 %v199
    %v235 = vunpack.c.l.b16 %v200
    %v236 = vunpack.c.l.b16 %v201
    %v237 = vunpack.c.l.b16 %v202
    %v238 = vunpack.c.l.b16 %v203
    %v239 = vunpack.c.l.b16 %v204
    %v240 = vunpack.c.l.b16 %v205
    %v241 = vunpack.c.l.b16 %v206
    %v242 = vunpack.c.l.b16 %v207
    %v243 = vunpack.c.l.b16 %v208
    %v244 = vunpack.c.l.b16 %v209
    %v245 = vunpack.c.l.b16 %v210
    %v246 = vunpack.c.l.b16 %v211
    %v247 = vunpack.c.l.b16 %v212
    %v248 = vpack.c.b16 %v233, %v232
    %v249 = vpack.c.b16 %v235, %v234
    %v250 = vpack.c.b16 %v237, %v236
    %v251 = vpack.c.b16 %v239, %v238
    %v252 = vpack.c.b16 %v241, %v240
    %v253 = vpack.c.b16 %v243, %v242
    %v254 = vpack.c.b16 %v245, %v244
    %v255 = vpack.c.b16 %v247, %v246
    %264 = vmatprep.subr.bf16.mxu0 0
    %265 = vmatpush1.bf16.msra.mxu0 %v248
    %266 = vmatprep.subr.bf16.mxu0 0
    %267 = vmatpush1.bf16.msra.mxu0 %v249
    %268 = vmatprep.subr.bf16.mxu0 0
    %269 = vmatpush1.bf16.msra.mxu0 %v250
    %270 = vmatprep.subr.bf16.mxu0 0
    %271 = vmatpush1.bf16.msra.mxu0 %v251
    %272 = vmatprep.subr.bf16.mxu0 0
    %273 = vmatpush1.bf16.msra.mxu0 %v252
    %274 = vmatprep.subr.bf16.mxu0 0
    %275 = vmatpush1.bf16.msra.mxu0 %v253
    %276 = vmatprep.subr.bf16.mxu0 0
    %277 = vmatpush1.bf16.msra.mxu0 %v254
    %278 = vmatprep.subr.bf16.mxu0 0
    %279 = vmatpush1.bf16.msra.mxu0 %v255
    %280 = vmatprep.subr.bf16.mxu0 0
    %281 = vmatpush1.bf16.msra.mxu0 0
    %282 = vmatprep.subr.bf16.mxu0 0
    %283 = vmatpush1.bf16.msra.mxu0 0
    %284 = vmatprep.subr.bf16.mxu0 0
    %285 = vmatpush1.bf16.msra.mxu0 0
    %286 = vmatprep.subr.bf16.mxu0 0
    %287 = vmatpush1.bf16.msra.mxu0 0
    %288 = vmatprep.subr.bf16.mxu0 0
    %289 = vmatpush1.bf16.msra.mxu0 0
    %290 = vmatprep.subr.bf16.mxu0 0
    %291 = vmatpush1.bf16.msra.mxu0 0
    %292 = vmatprep.subr.bf16.mxu0 0
    %293 = vmatpush1.bf16.msra.mxu0 0
    %294 = vmatprep.subr.bf16.mxu0 0
    %295 = vmatpush1.bf16.msra.mxu0 0
    %296 = vmatprep.mubr.bf16.mxu0 0
    %297 = vmatmul.mubr.bf16.gmra.mrb[0].mxu0 %v215
    %v298 = vpop.f32.mrb[0].mxu0
    %v299 = vadd.f32 0.0, %v298
    %v300 = vpop.f32.mrb[0].mxu0
    %v301 = vpop.f32.mrb[0].mxu0
    %v302 = vpop.f32.mrb[0].mxu0
    %303 = vdwg.mxu0
    %v304 = vadd.f32 %v151, %v299
    %v305 = vxor.u32 %v304, 2147483648
    %v306 = vmul.f32 %v305, 1.442695
    %v307 = vpow.pop %v306
    %v308 = vadd.f32 %v307, 1.0
    %v309 = vrcp.pop %v308
    %v310 = vmul.f32 1.0, %v309
    %311 = vrot.lane.b32.xlu0 %v299, 64
    %v312 = vpop.permute.xlu0 %311
    %v314 = vlaneseq
    %v315 = vshrl.u32 %v314, 7
    %v316 = vsub.s32 0, %v315
    %v317 = vrot.slane %v213, %v316
    %v319 = vadd.f32 %v312, %v317
    %v320 = vmul.f32 %v310, %v319
    %v321 = vadd.f32 %v182, %v320
    %v322 = vtanh.pop %v321
    %323 = vrot.lane.b32.xlu0 %v310, 32
    %v324 = vpop.permute.xlu0 %323
    %v325 = vsub.f32 1.0, %v324
    %v326 = vmul.f32 %v325, %v322
    %v327 = vmul.f32 %v324, %v214
    %v328 = vadd.f32 %v326, %v327
    %v329 = vpack.c.bf16 %v328, %v328
    %330 = vmatprep.subr.bf16.mxu0 0
    %331 = vmatpush1.bf16.msra.mxu0 %v248
    %332 = vmatprep.subr.bf16.mxu0 0
    %333 = vmatpush1.bf16.msra.mxu0 %v249
    %334 = vmatprep.subr.bf16.mxu0 0
    %335 = vmatpush1.bf16.msra.mxu0 %v250
    %336 = vmatprep.subr.bf16.mxu0 0
    %337 = vmatpush1.bf16.msra.mxu0 %v251
    %338 = vmatprep.subr.bf16.mxu0 0
    %339 = vmatpush1.bf16.msra.mxu0 %v252
    %340 = vmatprep.subr.bf16.mxu0 0
    %341 = vmatpush1.bf16.msra.mxu0 %v253
    %342 = vmatprep.subr.bf16.mxu0 0
    %343 = vmatpush1.bf16.msra.mxu0 %v254
    %344 = vmatprep.subr.bf16.mxu0 0
    %345 = vmatpush1.bf16.msra.mxu0 %v255
    %346 = vmatprep.subr.bf16.mxu0 0
    %347 = vmatpush1.bf16.msra.mxu0 0
    %348 = vmatprep.subr.bf16.mxu0 0
    %349 = vmatpush1.bf16.msra.mxu0 0
    %350 = vmatprep.subr.bf16.mxu0 0
    %351 = vmatpush1.bf16.msra.mxu0 0
    %352 = vmatprep.subr.bf16.mxu0 0
    %353 = vmatpush1.bf16.msra.mxu0 0
    %354 = vmatprep.subr.bf16.mxu0 0
    %355 = vmatpush1.bf16.msra.mxu0 0
    %356 = vmatprep.subr.bf16.mxu0 0
    %357 = vmatpush1.bf16.msra.mxu0 0
    %358 = vmatprep.subr.bf16.mxu0 0
    %359 = vmatpush1.bf16.msra.mxu0 0
    %360 = vmatprep.subr.bf16.mxu0 0
    %361 = vmatpush1.bf16.msra.mxu0 0
    %362 = vmatprep.mubr.bf16.mxu0 0
    %363 = vmatmul.mubr.bf16.gmra.mrb[0].mxu0 %v329
    %v364 = vpop.f32.mrb[0].mxu0
    %v365 = vadd.f32 0.0, %v364
    %v366 = vpop.f32.mrb[0].mxu0
    %v367 = vpop.f32.mrb[0].mxu0
    %v368 = vpop.f32.mrb[0].mxu0
    %369 = vdwg.mxu0
    %v370 = vadd.f32 %v154, %v365
    %v371 = vxor.u32 %v370, 2147483648
    %v372 = vmul.f32 %v371, 1.442695
    %v373 = vpow.pop %v372
    %v374 = vadd.f32 %v373, 1.0
    %v375 = vrcp.pop %v374
    %v376 = vmul.f32 1.0, %v375
    %377 = vrot.lane.b32.xlu0 %v365, 64
    %v378 = vpop.permute.xlu0 %377
    %v379 = vadd.f32 %v378, %v317
    %v380 = vmul.f32 %v376, %v379
    %v381 = vadd.f32 %v184, %v380
    %v382 = vtanh.pop %v381
    %383 = vrot.lane.b32.xlu0 %v376, 32
    %v384 = vpop.permute.xlu0 %383
    %v385 = vsub.f32 1.0, %v384
    %v386 = vmul.f32 %v385, %v382
    %v387 = vmul.f32 %v384, %v328
    %v388 = vadd.f32 %v386, %v387
    %v389 = vpack.c.bf16 %v388, %v388
    %390 = vmatprep.subr.bf16.mxu0 0
    %391 = vmatpush1.bf16.msra.mxu0 %v248
    %392 = vmatprep.subr.bf16.mxu0 0
    %393 = vmatpush1.bf16.msra.mxu0 %v249
    %394 = vmatprep.subr.bf16.mxu0 0
    %395 = vmatpush1.bf16.msra.mxu0 %v250
    %396 = vmatprep.subr.bf16.mxu0 0
    %397 = vmatpush1.bf16.msra.mxu0 %v251
    %398 = vmatprep.subr.bf16.mxu0 0
    %399 = vmatpush1.bf16.msra.mxu0 %v252
    %400 = vmatprep.subr.bf16.mxu0 0
    %401 = vmatpush1.bf16.msra.mxu0 %v253
    %402 = vmatprep.subr.bf16.mxu0 0
    %403 = vmatpush1.bf16.msra.mxu0 %v254
    %404 = vmatprep.subr.bf16.mxu0 0
    %405 = vmatpush1.bf16.msra.mxu0 %v255
    %406 = vmatprep.subr.bf16.mxu0 0
    %407 = vmatpush1.bf16.msra.mxu0 0
    %408 = vmatprep.subr.bf16.mxu0 0
    %409 = vmatpush1.bf16.msra.mxu0 0
    %410 = vmatprep.subr.bf16.mxu0 0
    %411 = vmatpush1.bf16.msra.mxu0 0
    %412 = vmatprep.subr.bf16.mxu0 0
    %413 = vmatpush1.bf16.msra.mxu0 0
    %414 = vmatprep.subr.bf16.mxu0 0
    %415 = vmatpush1.bf16.msra.mxu0 0
    %416 = vmatprep.subr.bf16.mxu0 0
    %417 = vmatpush1.bf16.msra.mxu0 0
    %418 = vmatprep.subr.bf16.mxu0 0
    %419 = vmatpush1.bf16.msra.mxu0 0
    %420 = vmatprep.subr.bf16.mxu0 0
    %421 = vmatpush1.bf16.msra.mxu0 0
    %422 = vmatprep.mubr.bf16.mxu0 0
    %423 = vmatmul.mubr.bf16.gmra.mrb[0].mxu0 %v389
    %v424 = vpop.f32.mrb[0].mxu0
    %v425 = vadd.f32 0.0, %v424
    %v426 = vpop.f32.mrb[0].mxu0
    %v427 = vpop.f32.mrb[0].mxu0
    %v428 = vpop.f32.mrb[0].mxu0
    %429 = vdwg.mxu0
    %v430 = vadd.f32 %v159, %v425
    %v431 = vxor.u32 %v430, 2147483648
    %v432 = vmul.f32 %v431, 1.442695
    %v433 = vpow.pop %v432
    %v434 = vadd.f32 %v433, 1.0
    %v435 = vrcp.pop %v434
    %v436 = vmul.f32 1.0, %v435
    %437 = vrot.lane.b32.xlu0 %v425, 64
    %v438 = vpop.permute.xlu0 %437
    %v439 = vadd.f32 %v438, %v317
    %v440 = vmul.f32 %v436, %v439
    %v441 = vadd.f32 %v186, %v440
    %v442 = vtanh.pop %v441
    %443 = vrot.lane.b32.xlu0 %v436, 32
    %v444 = vpop.permute.xlu0 %443
    %v445 = vsub.f32 1.0, %v444
    %v446 = vmul.f32 %v445, %v442
    %v447 = vmul.f32 %v444, %v388
    %v448 = vadd.f32 %v446, %v447
    %v449 = vpack.c.bf16 %v448, %v448
    %450 = vmatprep.subr.bf16.mxu0 0
    %451 = vmatpush1.bf16.msra.mxu0 %v248
    %452 = vmatprep.subr.bf16.mxu0 0
    %453 = vmatpush1.bf16.msra.mxu0 %v249
    %454 = vmatprep.subr.bf16.mxu0 0
    %455 = vmatpush1.bf16.msra.mxu0 %v250
    %456 = vmatprep.subr.bf16.mxu0 0
    %457 = vmatpush1.bf16.msra.mxu0 %v251
    %458 = vmatprep.subr.bf16.mxu0 0
    %459 = vmatpush1.bf16.msra.mxu0 %v252
    %460 = vmatprep.subr.bf16.mxu0 0
    %461 = vmatpush1.bf16.msra.mxu0 %v253
    %462 = vmatprep.subr.bf16.mxu0 0
    %463 = vmatpush1.bf16.msra.mxu0 %v254
    %464 = vmatprep.subr.bf16.mxu0 0
    %465 = vmatpush1.bf16.msra.mxu0 %v255
    %466 = vmatprep.subr.bf16.mxu0 0
    %467 = vmatpush1.bf16.msra.mxu0 0
    %468 = vmatprep.subr.bf16.mxu0 0
    %469 = vmatpush1.bf16.msra.mxu0 0
    %470 = vmatprep.subr.bf16.mxu0 0
    %471 = vmatpush1.bf16.msra.mxu0 0
    %472 = vmatprep.subr.bf16.mxu0 0
    %473 = vmatpush1.bf16.msra.mxu0 0
    %474 = vmatprep.subr.bf16.mxu0 0
    %475 = vmatpush1.bf16.msra.mxu0 0
    %476 = vmatprep.subr.bf16.mxu0 0
    %477 = vmatpush1.bf16.msra.mxu0 0
    %478 = vmatprep.subr.bf16.mxu0 0
    %479 = vmatpush1.bf16.msra.mxu0 0
    %480 = vmatprep.subr.bf16.mxu0 0
    %481 = vmatpush1.bf16.msra.mxu0 0
    %482 = vmatprep.mubr.bf16.mxu0 0
    %483 = vmatmul.mubr.bf16.gmra.mrb[0].mxu0 %v449
    %v484 = vpop.f32.mrb[0].mxu0
    %v485 = vadd.f32 0.0, %v484
    %v486 = vpop.f32.mrb[0].mxu0
    %v487 = vpop.f32.mrb[0].mxu0
    %v488 = vpop.f32.mrb[0].mxu0
    %489 = vdwg.mxu0
    %v490 = vadd.f32 %v162, %v485
    %v491 = vxor.u32 %v490, 2147483648
    %v492 = vmul.f32 %v491, 1.442695
    %v493 = vpow.pop %v492
    %v494 = vadd.f32 %v493, 1.0
    %v495 = vrcp.pop %v494
    %v496 = vmul.f32 1.0, %v495
    %497 = vrot.lane.b32.xlu0 %v485, 64
    %v498 = vpop.permute.xlu0 %497
    %v499 = vadd.f32 %v498, %v317
    %v500 = vmul.f32 %v496, %v499
    %v501 = vadd.f32 %v188, %v500
    %v502 = vtanh.pop %v501
    %503 = vrot.lane.b32.xlu0 %v496, 32
    %v504 = vpop.permute.xlu0 %503
    %v505 = vsub.f32 1.0, %v504
    %v506 = vmul.f32 %v505, %v502
    %v507 = vmul.f32 %v504, %v448
    %v508 = vadd.f32 %v506, %v507
    %v509 = vpack.c.bf16 %v508, %v508
    %510 = vmatprep.subr.bf16.mxu0 0
    %511 = vmatpush1.bf16.msra.mxu0 %v248
    %512 = vmatprep.subr.bf16.mxu0 0
    %513 = vmatpush1.bf16.msra.mxu0 %v249
    %514 = vmatprep.subr.bf16.mxu0 0
    %515 = vmatpush1.bf16.msra.mxu0 %v250
    %516 = vmatprep.subr.bf16.mxu0 0
    %517 = vmatpush1.bf16.msra.mxu0 %v251
    %518 = vmatprep.subr.bf16.mxu0 0
    %519 = vmatpush1.bf16.msra.mxu0 %v252
    %520 = vmatprep.subr.bf16.mxu0 0
    %521 = vmatpush1.bf16.msra.mxu0 %v253
    %522 = vmatprep.subr.bf16.mxu0 0
    %523 = vmatpush1.bf16.msra.mxu0 %v254
    %524 = vmatprep.subr.bf16.mxu0 0
    %525 = vmatpush1.bf16.msra.mxu0 %v255
    %526 = vmatprep.subr.bf16.mxu0 0
    %527 = vmatpush1.bf16.msra.mxu0 0
    %528 = vmatprep.subr.bf16.mxu0 0
    %529 = vmatpush1.bf16.msra.mxu0 0
    %530 = vmatprep.subr.bf16.mxu0 0
    %531 = vmatpush1.bf16.msra.mxu0 0
    %532 = vmatprep.subr.bf16.mxu0 0
    %533 = vmatpush1.bf16.msra.mxu0 0
    %534 = vmatprep.subr.bf16.mxu0 0
    %535 = vmatpush1.bf16.msra.mxu0 0
    %536 = vmatprep.subr.bf16.mxu0 0
    %537 = vmatpush1.bf16.msra.mxu0 0
    %538 = vmatprep.subr.bf16.mxu0 0
    %539 = vmatpush1.bf16.msra.mxu0 0
    %540 = vmatprep.subr.bf16.mxu0 0
    %541 = vmatpush1.bf16.msra.mxu0 0
    %542 = vmatprep.mubr.bf16.mxu0 0
    %543 = vmatmul.mubr.bf16.gmra.mrb[0].mxu0 %v509
    %v544 = vpop.f32.mrb[0].mxu0
    %v545 = vadd.f32 0.0, %v544
    %v546 = vpop.f32.mrb[0].mxu0
    %v547 = vpop.f32.mrb[0].mxu0
    %v548 = vpop.f32.mrb[0].mxu0
    %549 = vdwg.mxu0
    %v550 = vadd.f32 %v167, %v545
    %v551 = vxor.u32 %v550, 2147483648
    %v552 = vmul.f32 %v551, 1.442695
    %v553 = vpow.pop %v552
    %v554 = vadd.f32 %v553, 1.0
    %v555 = vrcp.pop %v554
    %v556 = vmul.f32 1.0, %v555
    %557 = vrot.lane.b32.xlu0 %v545, 64
    %v558 = vpop.permute.xlu0 %557
    %v559 = vadd.f32 %v558, %v317
    %v560 = vmul.f32 %v556, %v559
    %v561 = vadd.f32 %v190, %v560
    %v562 = vtanh.pop %v561
    %563 = vrot.lane.b32.xlu0 %v556, 32
    %v564 = vpop.permute.xlu0 %563
    %v565 = vsub.f32 1.0, %v564
    %v566 = vmul.f32 %v565, %v562
    %v567 = vmul.f32 %v564, %v508
    %v568 = vadd.f32 %v566, %v567
    %v569 = vpack.c.bf16 %v568, %v568
    %570 = vmatprep.subr.bf16.mxu0 0
    %571 = vmatpush1.bf16.msra.mxu0 %v248
    %572 = vmatprep.subr.bf16.mxu0 0
    %573 = vmatpush1.bf16.msra.mxu0 %v249
    %574 = vmatprep.subr.bf16.mxu0 0
    %575 = vmatpush1.bf16.msra.mxu0 %v250
    %576 = vmatprep.subr.bf16.mxu0 0
    %577 = vmatpush1.bf16.msra.mxu0 %v251
    %578 = vmatprep.subr.bf16.mxu0 0
    %579 = vmatpush1.bf16.msra.mxu0 %v252
    %580 = vmatprep.subr.bf16.mxu0 0
    %581 = vmatpush1.bf16.msra.mxu0 %v253
    %582 = vmatprep.subr.bf16.mxu0 0
    %583 = vmatpush1.bf16.msra.mxu0 %v254
    %584 = vmatprep.subr.bf16.mxu0 0
    %585 = vmatpush1.bf16.msra.mxu0 %v255
    %586 = vmatprep.subr.bf16.mxu0 0
    %587 = vmatpush1.bf16.msra.mxu0 0
    %588 = vmatprep.subr.bf16.mxu0 0
    %589 = vmatpush1.bf16.msra.mxu0 0
    %590 = vmatprep.subr.bf16.mxu0 0
    %591 = vmatpush1.bf16.msra.mxu0 0
    %592 = vmatprep.subr.bf16.mxu0 0
    %593 = vmatpush1.bf16.msra.mxu0 0
    %594 = vmatprep.subr.bf16.mxu0 0
    %595 = vmatpush1.bf16.msra.mxu0 0
    %596 = vmatprep.subr.bf16.mxu0 0
    %597 = vmatpush1.bf16.msra.mxu0 0
    %598 = vmatprep.subr.bf16.mxu0 0
    %599 = vmatpush1.bf16.msra.mxu0 0
    %600 = vmatprep.subr.bf16.mxu0 0
    %601 = vmatpush1.bf16.msra.mxu0 0
    %602 = vmatprep.mubr.bf16.mxu0 0
    %603 = vmatmul.mubr.bf16.gmra.mrb[0].mxu0 %v569
    %v604 = vpop.f32.mrb[0].mxu0
    %v605 = vadd.f32 0.0, %v604
    %v606 = vpop.f32.mrb[0].mxu0
    %v607 = vpop.f32.mrb[0].mxu0
    %v608 = vpop.f32.mrb[0].mxu0
    %609 = vdwg.mxu0
    %v610 = vadd.f32 %v170, %v605
    %v611 = vxor.u32 %v610, 2147483648
    %v612 = vmul.f32 %v611, 1.442695
    %v613 = vpow.pop %v612
    %v614 = vadd.f32 %v613, 1.0
    %v615 = vrcp.pop %v614
    %v616 = vmul.f32 1.0, %v615
    %617 = vrot.lane.b32.xlu0 %v605, 64
    %v618 = vpop.permute.xlu0 %617
    %v619 = vadd.f32 %v618, %v317
    %v620 = vmul.f32 %v616, %v619
    %v621 = vadd.f32 %v192, %v620
    %v622 = vtanh.pop %v621
    %623 = vrot.lane.b32.xlu0 %v616, 32
    %v624 = vpop.permute.xlu0 %623
    %v625 = vsub.f32 1.0, %v624
    %v626 = vmul.f32 %v625, %v622
    %v627 = vmul.f32 %v624, %v568
    %v628 = vadd.f32 %v626, %v627
    %v629 = vpack.c.bf16 %v628, %v628
    %630 = vmatprep.subr.bf16.mxu0 0
    %631 = vmatpush1.bf16.msra.mxu0 %v248
    %632 = vmatprep.subr.bf16.mxu0 0
    %633 = vmatpush1.bf16.msra.mxu0 %v249
    %634 = vmatprep.subr.bf16.mxu0 0
    %635 = vmatpush1.bf16.msra.mxu0 %v250
    %636 = vmatprep.subr.bf16.mxu0 0
    %637 = vmatpush1.bf16.msra.mxu0 %v251
    %638 = vmatprep.subr.bf16.mxu0 0
    %639 = vmatpush1.bf16.msra.mxu0 %v252
    %640 = vmatprep.subr.bf16.mxu0 0
    %641 = vmatpush1.bf16.msra.mxu0 %v253
    %642 = vmatprep.subr.bf16.mxu0 0
    %643 = vmatpush1.bf16.msra.mxu0 %v254
    %644 = vmatprep.subr.bf16.mxu0 0
    %645 = vmatpush1.bf16.msra.mxu0 %v255
    %646 = vmatprep.subr.bf16.mxu0 0
    %647 = vmatpush1.bf16.msra.mxu0 0
    %648 = vmatprep.subr.bf16.mxu0 0
    %649 = vmatpush1.bf16.msra.mxu0 0
    %650 = vmatprep.subr.bf16.mxu0 0
    %651 = vmatpush1.bf16.msra.mxu0 0
    %652 = vmatprep.subr.bf16.mxu0 0
    %653 = vmatpush1.bf16.msra.mxu0 0
    %654 = vmatprep.subr.bf16.mxu0 0
    %655 = vmatpush1.bf16.msra.mxu0 0
    %656 = vmatprep.subr.bf16.mxu0 0
    %657 = vmatpush1.bf16.msra.mxu0 0
    %658 = vmatprep.subr.bf16.mxu0 0
    %659 = vmatpush1.bf16.msra.mxu0 0
    %660 = vmatprep.subr.bf16.mxu0 0
    %661 = vmatpush1.bf16.msra.mxu0 0
    %662 = vmatprep.mubr.bf16.mxu0 0
    %663 = vmatmul.mubr.bf16.gmra.mrb[0].mxu0 %v629
    %v664 = vpop.f32.mrb[0].mxu0
    %v665 = vadd.f32 0.0, %v664
    %v666 = vpop.f32.mrb[0].mxu0
    %v667 = vpop.f32.mrb[0].mxu0
    %v668 = vpop.f32.mrb[0].mxu0
    %669 = vdwg.mxu0
    %v670 = vadd.f32 %v175, %v665
    %v671 = vxor.u32 %v670, 2147483648
    %v672 = vmul.f32 %v671, 1.442695
    %v673 = vpow.pop %v672
    %v674 = vadd.f32 %v673, 1.0
    %v675 = vrcp.pop %v674
    %v676 = vmul.f32 1.0, %v675
    %677 = vrot.lane.b32.xlu0 %v665, 64
    %v678 = vpop.permute.xlu0 %677
    %v679 = vadd.f32 %v678, %v317
    %v680 = vmul.f32 %v676, %v679
    %v681 = vadd.f32 %v194, %v680
    %v682 = vtanh.pop %v681
    %683 = vrot.lane.b32.xlu0 %v676, 32
    %v684 = vpop.permute.xlu0 %683
    %v685 = vsub.f32 1.0, %v684
    %v686 = vmul.f32 %v685, %v682
    %v687 = vmul.f32 %v684, %v628
    %v688 = vadd.f32 %v686, %v687
    %v689 = vpack.c.bf16 %v688, %v688
    %690 = vmatprep.subr.bf16.mxu0 0
    %691 = vmatpush1.bf16.msra.mxu0 %v248
    %692 = vmatprep.subr.bf16.mxu0 0
    %693 = vmatpush1.bf16.msra.mxu0 %v249
    %694 = vmatprep.subr.bf16.mxu0 0
    %695 = vmatpush1.bf16.msra.mxu0 %v250
    %696 = vmatprep.subr.bf16.mxu0 0
    %697 = vmatpush1.bf16.msra.mxu0 %v251
    %698 = vmatprep.subr.bf16.mxu0 0
    %699 = vmatpush1.bf16.msra.mxu0 %v252
    %700 = vmatprep.subr.bf16.mxu0 0
    %701 = vmatpush1.bf16.msra.mxu0 %v253
    %702 = vmatprep.subr.bf16.mxu0 0
    %703 = vmatpush1.bf16.msra.mxu0 %v254
    %704 = vmatprep.subr.bf16.mxu0 0
    %705 = vmatpush1.bf16.msra.mxu0 %v255
    %706 = vmatprep.subr.bf16.mxu0 0
    %707 = vmatpush1.bf16.msra.mxu0 0
    %708 = vmatprep.subr.bf16.mxu0 0
    %709 = vmatpush1.bf16.msra.mxu0 0
    %710 = vmatprep.subr.bf16.mxu0 0
    %711 = vmatpush1.bf16.msra.mxu0 0
    %712 = vmatprep.subr.bf16.mxu0 0
    %713 = vmatpush1.bf16.msra.mxu0 0
    %714 = vmatprep.subr.bf16.mxu0 0
    %715 = vmatpush1.bf16.msra.mxu0 0
    %716 = vmatprep.subr.bf16.mxu0 0
    %717 = vmatpush1.bf16.msra.mxu0 0
    %718 = vmatprep.subr.bf16.mxu0 0
    %719 = vmatpush1.bf16.msra.mxu0 0
    %720 = vmatprep.subr.bf16.mxu0 0
    %721 = vmatpush1.bf16.msra.mxu0 0
    %722 = vmatprep.mubr.bf16.mxu0 0
    %723 = vmatmul.mubr.bf16.gmra.mrb[0].mxu0 %v689
    %v724 = vpop.f32.mrb[0].mxu0
    %v725 = vadd.f32 0.0, %v724
    %v726 = vpop.f32.mrb[0].mxu0
    %v727 = vpop.f32.mrb[0].mxu0
    %v728 = vpop.f32.mrb[0].mxu0
    %729 = vdwg.mxu0
    %v730 = vadd.f32 %v178, %v725
    %v731 = vxor.u32 %v730, 2147483648
    %v732 = vmul.f32 %v731, 1.442695
    %v733 = vpow.pop %v732
    %v734 = vadd.f32 %v733, 1.0
    %v735 = vrcp.pop %v734
    %v736 = vmul.f32 1.0, %v735
    %737 = vrot.lane.b32.xlu0 %v725, 64
    %v738 = vpop.permute.xlu0 %737
    %v739 = vadd.f32 %v738, %v317
    %v740 = vmul.f32 %v736, %v739
    %v741 = vadd.f32 %v196, %v740
    %v742 = vtanh.pop %v741
    %743 = vrot.lane.b32.xlu0 %v736, 32
    %v744 = vpop.permute.xlu0 %743
    %v745 = vsub.f32 1.0, %v744
    %v746 = vmul.f32 %v745, %v742
    %v747 = vmul.f32 %v744, %v688
    %v748 = vadd.f32 %v746, %v747
    %749 = vst [vmem:[#allocation3] sm:$0xff] %v748
    %v750 = vld [vmem:[%s1] sm:$0xff]
    %v751 = vpack.c.bf16 %v388, %v328
    %v752 = vpack.c.bf16 %v508, %v448
    %v753 = vpack.c.bf16 %v628, %v568
    %v754 = vpack.c.bf16 %v748, %v688
    %v755 = vld [vmem:[%s7] sm:$0xf]
    %v756 = vld [vmem:[%s7 + $0x4] sm:$0xf]
    %v757 = vld [vmem:[%s7 + $0x8] sm:$0xf]
    %v758 = vld [vmem:[%s7 + $0xc] sm:$0xf]
    %v759 = vld [vmem:[%s7 + $0x10] sm:$0xf]
    %v760 = vld [vmem:[%s7 + $0x14] sm:$0xf]
    %v761 = vld [vmem:[%s7 + $0x18] sm:$0xf]
    %v762 = vld [vmem:[%s7 + $0x1c] sm:$0xf]
    %v763 = vld [vmem:[%s7 + $0x20] sm:$0xf]
    %v764 = vld [vmem:[%s7 + $0x24] sm:$0xf]
    %v765 = vld [vmem:[%s7 + $0x28] sm:$0xf]
    %v766 = vld [vmem:[%s7 + $0x2c] sm:$0xf]
    %v767 = vld [vmem:[%s7 + $0x30] sm:$0xf]
    %v768 = vld [vmem:[%s7 + $0x34] sm:$0xf]
    %v769 = vld [vmem:[%s7 + $0x38] sm:$0xf]
    %v770 = vld [vmem:[%s7 + $0x3c] sm:$0xf]
    %v771 = vld [vmem:[%s8] sm:$0x1]
    %v773 = vlaneseq
    %v774 = vshrl.u32 %v773, 7
    %v775 = vsub.s32 0, %v774
    %v776 = vrot.slane %v771, %v775
    %v794 = vunpack.c.l.b16 %v755
    %v795 = vunpack.c.l.b16 %v756
    %v796 = vunpack.c.l.b16 %v757
    %v797 = vunpack.c.l.b16 %v758
    %v798 = vunpack.c.l.b16 %v759
    %v799 = vunpack.c.l.b16 %v760
    %v800 = vunpack.c.l.b16 %v761
    %v801 = vunpack.c.l.b16 %v762
    %v802 = vunpack.c.l.b16 %v763
    %v803 = vunpack.c.l.b16 %v764
    %v804 = vunpack.c.l.b16 %v765
    %v805 = vunpack.c.l.b16 %v766
    %v806 = vunpack.c.l.b16 %v767
    %v807 = vunpack.c.l.b16 %v768
    %v808 = vunpack.c.l.b16 %v769
    %v809 = vunpack.c.l.b16 %v770
    %v810 = vpack.c.b16 %v795, %v794
    %v811 = vpack.c.b16 %v797, %v796
    %v812 = vpack.c.b16 %v799, %v798
    %v813 = vpack.c.b16 %v801, %v800
    %v814 = vpack.c.b16 %v803, %v802
    %v815 = vpack.c.b16 %v805, %v804
    %v816 = vpack.c.b16 %v807, %v806
    %v817 = vpack.c.b16 %v809, %v808
    %826 = vmatprep.subr.bf16.mxu0 0
    %827 = vmatpush1.bf16.msra.mxu0 %v810
    %828 = vmatprep.subr.bf16.mxu0 0
    %829 = vmatpush1.bf16.msra.mxu0 %v811
    %830 = vmatprep.subr.bf16.mxu0 0
    %831 = vmatpush1.bf16.msra.mxu0 %v812
    %832 = vmatprep.subr.bf16.mxu0 0
    %833 = vmatpush1.bf16.msra.mxu0 %v813
    %834 = vmatprep.subr.bf16.mxu0 0
    %835 = vmatpush1.bf16.msra.mxu0 %v814
    %836 = vmatprep.subr.bf16.mxu0 0
    %837 = vmatpush1.bf16.msra.mxu0 %v815
    %838 = vmatprep.subr.bf16.mxu0 0
    %839 = vmatpush1.bf16.msra.mxu0 %v816
    %840 = vmatprep.subr.bf16.mxu0 0
    %841 = vmatpush1.bf16.msra.mxu0 %v817
    %842 = vmatprep.subr.bf16.mxu0 0
    %843 = vmatpush1.bf16.msra.mxu0 0
    %844 = vmatprep.subr.bf16.mxu0 0
    %845 = vmatpush1.bf16.msra.mxu0 0
    %846 = vmatprep.subr.bf16.mxu0 0
    %847 = vmatpush1.bf16.msra.mxu0 0
    %848 = vmatprep.subr.bf16.mxu0 0
    %849 = vmatpush1.bf16.msra.mxu0 0
    %850 = vmatprep.subr.bf16.mxu0 0
    %851 = vmatpush1.bf16.msra.mxu0 0
    %852 = vmatprep.subr.bf16.mxu0 0
    %853 = vmatpush1.bf16.msra.mxu0 0
    %854 = vmatprep.subr.bf16.mxu0 0
    %855 = vmatpush1.bf16.msra.mxu0 0
    %856 = vmatprep.subr.bf16.mxu0 0
    %857 = vmatpush1.bf16.msra.mxu0 0
    %858 = vmatprep.mubr.bf16.mxu0 0
    %859 = vmatmul.mubr.bf16.gmra.mrb[0].mxu0 %v751
    %v860 = vpop.f32.mrb[0].mxu0
    %v861 = vadd.f32 %v776, %v860
    %v862 = vpop.f32.mrb[0].mxu0
    %v863 = vpop.f32.mrb[0].mxu0
    %v864 = vadd.f32 %v776, %v863
    %v865 = vpop.f32.mrb[0].mxu0
    %866 = vmatprep.mubr.bf16.mxu0 0
    %867 = vmatmul.mubr.bf16.gmra.mrb[0].mxu0 %v752
    %v868 = vpop.f32.mrb[0].mxu0
    %v869 = vadd.f32 %v776, %v868
    %v870 = vpop.f32.mrb[0].mxu0
    %v871 = vpop.f32.mrb[0].mxu0
    %v872 = vadd.f32 %v776, %v871
    %v873 = vpop.f32.mrb[0].mxu0
    %874 = vmatprep.mubr.bf16.mxu0 0
    %875 = vmatmul.mubr.bf16.gmra.mrb[0].mxu0 %v753
    %v876 = vpop.f32.mrb[0].mxu0
    %v877 = vadd.f32 %v776, %v876
    %v878 = vpop.f32.mrb[0].mxu0
    %v879 = vpop.f32.mrb[0].mxu0
    %v880 = vadd.f32 %v776, %v879
    %v881 = vpop.f32.mrb[0].mxu0
    %882 = vmatprep.mubr.bf16.mxu0 0
    %883 = vmatmul.mubr.bf16.gmra.mrb[0].mxu0 %v754
    %v884 = vpop.f32.mrb[0].mxu0
    %v885 = vadd.f32 %v776, %v884
    %v886 = vpop.f32.mrb[0].mxu0
    %v887 = vpop.f32.mrb[0].mxu0
    %v888 = vadd.f32 %v776, %v887
    %v889 = vpop.f32.mrb[0].mxu0
    %890 = vdwg.mxu0
    %v891 = vpack.c.bf16 %v750, %v750
    %v892 = vld [vmem:[%s9] sm:$0xf]
    %v893 = vld [vmem:[%s9 + $0x4] sm:$0xf]
    %v894 = vld [vmem:[%s9 + $0x8] sm:$0xf]
    %v895 = vld [vmem:[%s9 + $0xc] sm:$0xf]
    %v896 = vld [vmem:[%s10] sm:$0x1]
    %v898 = vlaneseq
    %v899 = vshrl.u32 %v898, 7
    %v900 = vsub.s32 0, %v899
    %v901 = vrot.slane %v896, %v900
    %v907 = vunpack.c.l.b16 %v892
    %v908 = vunpack.c.l.b16 %v893
    %v909 = vunpack.c.l.b16 %v894
    %v910 = vunpack.c.l.b16 %v895
    %v911 = vpack.c.b16 %v908, %v907
    %v912 = vpack.c.b16 %v910, %v909
    %v916 = vsel %vm103, %v891, 0
    %918 = vmatprep.subr.bf16.mxu0 0
    %919 = vmatpush1.bf16.msra.mxu0 %v911
    %920 = vmatprep.subr.bf16.mxu0 0
    %921 = vmatpush1.bf16.msra.mxu0 %v912
    %922 = vmatprep.subr.bf16.mxu0 0
    %923 = vmatpush1.bf16.msra.mxu0 0
    %924 = vmatprep.subr.bf16.mxu0 0
    %925 = vmatpush1.bf16.msra.mxu0 0
    %926 = vmatprep.subr.bf16.mxu0 0
    %927 = vmatpush1.bf16.msra.mxu0 0
    %928 = vmatprep.subr.bf16.mxu0 0
    %929 = vmatpush1.bf16.msra.mxu0 0
    %930 = vmatprep.subr.bf16.mxu0 0
    %931 = vmatpush1.bf16.msra.mxu0 0
    %932 = vmatprep.subr.bf16.mxu0 0
    %933 = vmatpush1.bf16.msra.mxu0 0
    %934 = vmatprep.subr.bf16.mxu0 0
    %935 = vmatpush1.bf16.msra.mxu0 0
    %936 = vmatprep.subr.bf16.mxu0 0
    %937 = vmatpush1.bf16.msra.mxu0 0
    %938 = vmatprep.subr.bf16.mxu0 0
    %939 = vmatpush1.bf16.msra.mxu0 0
    %940 = vmatprep.subr.bf16.mxu0 0
    %941 = vmatpush1.bf16.msra.mxu0 0
    %942 = vmatprep.subr.bf16.mxu0 0
    %943 = vmatpush1.bf16.msra.mxu0 0
    %944 = vmatprep.subr.bf16.mxu0 0
    %945 = vmatpush1.bf16.msra.mxu0 0
    %946 = vmatprep.subr.bf16.mxu0 0
    %947 = vmatpush1.bf16.msra.mxu0 0
    %948 = vmatprep.subr.bf16.mxu0 0
    %949 = vmatpush1.bf16.msra.mxu0 0
    %950 = vmatprep.mubr.bf16.mxu0 0
    %951 = vmatmul.mubr.bf16.gmra.mrb[0].mxu0 %v916
    %v952 = vpop.f32.mrb[0].mxu0
    %v953 = vadd.f32 %v901, %v952
    %v954 = vpop.f32.mrb[0].mxu0
    %v955 = vpop.f32.mrb[0].mxu0
    %v956 = vpop.f32.mrb[0].mxu0
    %957 = vdwg.mxu0
    %v958 = vadd.f32 %v861, %v953
    %v959 = vadd.f32 %v864, %v953
    %v960 = vadd.f32 %v869, %v953
    %v961 = vadd.f32 %v872, %v953
    %v962 = vadd.f32 %v877, %v953
    %v963 = vadd.f32 %v880, %v953
    %v964 = vadd.f32 %v885, %v953
    %v965 = vadd.f32 %v888, %v953
    %v966 = vmax.f32 %v958, 0.0
    %v967 = vmax.f32 %v959, 0.0
    %v968 = vmax.f32 %v960, 0.0
    %v969 = vmax.f32 %v961, 0.0
    %v970 = vmax.f32 %v962, 0.0
    %v971 = vmax.f32 %v963, 0.0
    %v972 = vmax.f32 %v964, 0.0
    %v973 = vmax.f32 %v965, 0.0
    %v974 = vld [vmem:[%s11] sm:$0x1]
    %v976 = vlaneseq
    %v977 = vshrl.u32 %v976, 7
    %v978 = vsub.s32 0, %v977
    %v979 = vrot.slane %v974, %v978
    %v981 = vmul.f32 %v966, %v979
    %v982 = vmul.f32 %v967, %v979
    %v983 = vmul.f32 %v968, %v979
    %v984 = vmul.f32 %v969, %v979
    %v985 = vmul.f32 %v970, %v979
    %v986 = vmul.f32 %v971, %v979
    %v987 = vmul.f32 %v972, %v979
    %v988 = vmul.f32 %v973, %v979
    %v989 = vsel %vm103, %v981, 0.0
    %990 = vadd.xlane.f32.xlu0 %v989
    %v991 = vpop.xlane.xlu0 %990
    %v992 = vsel %vm103, %v982, 0.0
    %993 = vadd.xlane.f32.xlu0 %v992
    %v994 = vpop.xlane.xlu0 %993
    %v995 = vsel %vm103, %v983, 0.0
    %996 = vadd.xlane.f32.xlu0 %v995
    %v997 = vpop.xlane.xlu0 %996
    %v998 = vsel %vm103, %v984, 0.0
    %999 = vadd.xlane.f32.xlu0 %v998
    %v1000 = vpop.xlane.xlu0 %999
    %v1001 = vsel %vm103, %v985, 0.0
    %1002 = vadd.xlane.f32.xlu0 %v1001
    %v1003 = vpop.xlane.xlu0 %1002
    %v1004 = vsel %vm103, %v986, 0.0
    %1005 = vadd.xlane.f32.xlu0 %v1004
    %v1006 = vpop.xlane.xlu0 %1005
    %v1007 = vsel %vm103, %v987, 0.0
    %1008 = vadd.xlane.f32.xlu0 %v1007
    %v1009 = vpop.xlane.xlu0 %1008
    %v1010 = vsel %vm103, %v988, 0.0
    %1011 = vadd.xlane.f32.xlu0 %v1010
    %v1012 = vpop.xlane.xlu0 %1011
    %v1013 = vmax.f32 %v991, %v1003
    %v1014 = vmax.f32 %v994, %v1006
    %v1015 = vmax.f32 %v997, %v1009
    %v1016 = vmax.f32 %v1000, %v1012
    %v1017 = vmax.f32 %v1013, %v1014
    %v1018 = vmax.f32 %v1015, %v1016
    %v1019 = vmax.f32 %v1017, %v1018
    %v1020 = vsub.f32 %v991, %v1019
    %v1021 = vsub.f32 %v994, %v1019
    %v1022 = vsub.f32 %v997, %v1019
    %v1023 = vsub.f32 %v1000, %v1019
    %v1024 = vsub.f32 %v1003, %v1019
    %v1025 = vsub.f32 %v1006, %v1019
    %v1026 = vsub.f32 %v1009, %v1019
    %v1027 = vsub.f32 %v1012, %v1019
    %v1028 = vmul.f32 %v1020, 1.442695
    %v1029 = vpow.pop %v1028
    %v1030 = vmul.f32 %v1021, 1.442695
    %v1031 = vpow.pop %v1030
    %v1032 = vmul.f32 %v1022, 1.442695
    %v1033 = vpow.pop %v1032
    %v1034 = vmul.f32 %v1023, 1.442695
    %v1035 = vpow.pop %v1034
    %v1036 = vmul.f32 %v1024, 1.442695
    %v1037 = vpow.pop %v1036
    %v1038 = vmul.f32 %v1025, 1.442695
    %v1039 = vpow.pop %v1038
    %v1040 = vmul.f32 %v1026, 1.442695
    %v1041 = vpow.pop %v1040
    %v1042 = vmul.f32 %v1027, 1.442695
    %v1043 = vpow.pop %v1042
    %v1044 = vadd.f32 %v1029, %v1031
    %v1045 = vadd.f32 %v1044, %v1033
    %v1046 = vadd.f32 %v1045, %v1035
    %v1047 = vadd.f32 %v1046, %v1037
    %v1048 = vadd.f32 %v1047, %v1039
    %v1049 = vadd.f32 %v1048, %v1041
    %v1050 = vadd.f32 %v1049, %v1043
    %v1051 = vrcp.pop %v1050
    %v1052 = vmul.f32 %v1029, %v1051
    %v1053 = vmul.f32 %v1031, %v1051
    %v1054 = vmul.f32 %v1033, %v1051
    %v1055 = vmul.f32 %v1035, %v1051
    %v1056 = vmul.f32 %v1037, %v1051
    %v1057 = vmul.f32 %v1039, %v1051
    %v1058 = vmul.f32 %v1041, %v1051
    %v1059 = vmul.f32 %v1043, %v1051
    %vm1060 = vcmask 7168
    %1061 = vst.msk [vmem:[%s21] sm:$0xff] %vm1060, %v1052
    %1062 = vst.msk [vmem:[%s21 + $0x8] sm:$0xff] %vm1060, %v1053
    %1063 = vst.msk [vmem:[%s21 + $0x10] sm:$0xff] %vm1060, %v1054
    %1064 = vst.msk [vmem:[%s21 + $0x18] sm:$0xff] %vm1060, %v1055
    %1065 = vst.msk [vmem:[%s21 + $0x20] sm:$0xff] %vm1060, %v1056
    %1066 = vst.msk [vmem:[%s21 + $0x28] sm:$0xff] %vm1060, %v1057
    %1067 = vst.msk [vmem:[%s21 + $0x30] sm:$0xff] %vm1060, %v1058
    %1068 = vst.msk [vmem:[%s21 + $0x38] sm:$0xff] %vm1060, %v1059
    %v1069 = vmul.f32 %v1052, %v328
    %v1070 = vmul.f32 %v1053, %v388
    %v1071 = vmul.f32 %v1054, %v448
    %v1072 = vmul.f32 %v1055, %v508
    %v1073 = vmul.f32 %v1056, %v568
    %v1074 = vmul.f32 %v1057, %v628
    %v1075 = vmul.f32 %v1058, %v688
    %v1076 = vmul.f32 %v1059, %v748
    %v1077 = vadd.f32 %v1069, %v1070
    %v1078 = vadd.f32 %v1077, %v1071
    %v1079 = vadd.f32 %v1078, %v1072
    %v1080 = vadd.f32 %v1079, %v1073
    %v1081 = vadd.f32 %v1080, %v1074
    %v1082 = vadd.f32 %v1081, %v1075
    %v1083 = vadd.f32 %v1082, %v1076
    %v1084 = vpack.c.bf16 %v1083, %v1083
    %v1085 = vld [vmem:[%s12] sm:$0xf]
    %v1086 = vld [vmem:[%s12 + $0x4] sm:$0xf]
    %v1087 = vld [vmem:[%s12 + $0x8] sm:$0xf]
    %v1088 = vld [vmem:[%s12 + $0xc] sm:$0xf]
    %v1089 = vld [vmem:[%s12 + $0x10] sm:$0xf]
    %v1090 = vld [vmem:[%s12 + $0x14] sm:$0xf]
    %v1091 = vld [vmem:[%s12 + $0x18] sm:$0xf]
    %v1092 = vld [vmem:[%s12 + $0x1c] sm:$0xf]
    %v1093 = vld [vmem:[%s12 + $0x20] sm:$0xf]
    %v1094 = vld [vmem:[%s12 + $0x24] sm:$0xf]
    %v1095 = vld [vmem:[%s12 + $0x28] sm:$0xf]
    %v1096 = vld [vmem:[%s12 + $0x2c] sm:$0xf]
    %v1097 = vld [vmem:[%s12 + $0x30] sm:$0xf]
    %v1098 = vld [vmem:[%s12 + $0x34] sm:$0xf]
    %v1099 = vld [vmem:[%s12 + $0x38] sm:$0xf]
    %v1100 = vld [vmem:[%s12 + $0x3c] sm:$0xf]
    %v1101 = vld [vmem:[%s13] sm:$0xf]
    %v1102 = vld [vmem:[%s13 + $0x4] sm:$0xf]
    %v1103 = vld [vmem:[%s13 + $0x8] sm:$0xf]
    %v1104 = vld [vmem:[%s13 + $0xc] sm:$0xf]
    %v1109 = vunpack.c.l.b16 %v1101
    %v1110 = vunpack.c.l.b16 %v1102
    %v1111 = vunpack.c.l.b16 %v1103
    %v1112 = vunpack.c.l.b16 %v1104
    %v1113 = vpack.c.b16 %v1110, %v1109
    %v1114 = vpack.c.b16 %v1112, %v1111
    %1117 = vmatprep.subr.bf16.mxu0 0
    %1118 = vmatpush1.bf16.msra.mxu0 %v1113
    %1119 = vmatprep.subr.bf16.mxu0 0
    %1120 = vmatpush1.bf16.msra.mxu0 %v1114
    %1121 = vmatprep.subr.bf16.mxu0 0
    %1122 = vmatpush1.bf16.msra.mxu0 0
    %1123 = vmatprep.subr.bf16.mxu0 0
    %1124 = vmatpush1.bf16.msra.mxu0 0
    %1125 = vmatprep.subr.bf16.mxu0 0
    %1126 = vmatpush1.bf16.msra.mxu0 0
    %1127 = vmatprep.subr.bf16.mxu0 0
    %1128 = vmatpush1.bf16.msra.mxu0 0
    %1129 = vmatprep.subr.bf16.mxu0 0
    %1130 = vmatpush1.bf16.msra.mxu0 0
    %1131 = vmatprep.subr.bf16.mxu0 0
    %1132 = vmatpush1.bf16.msra.mxu0 0
    %1133 = vmatprep.subr.bf16.mxu0 0
    %1134 = vmatpush1.bf16.msra.mxu0 0
    %1135 = vmatprep.subr.bf16.mxu0 0
    %1136 = vmatpush1.bf16.msra.mxu0 0
    %1137 = vmatprep.subr.bf16.mxu0 0
    %1138 = vmatpush1.bf16.msra.mxu0 0
    %1139 = vmatprep.subr.bf16.mxu0 0
    %1140 = vmatpush1.bf16.msra.mxu0 0
    %1141 = vmatprep.subr.bf16.mxu0 0
    %1142 = vmatpush1.bf16.msra.mxu0 0
    %1143 = vmatprep.subr.bf16.mxu0 0
    %1144 = vmatpush1.bf16.msra.mxu0 0
    %1145 = vmatprep.subr.bf16.mxu0 0
    %1146 = vmatpush1.bf16.msra.mxu0 0
    %1147 = vmatprep.subr.bf16.mxu0 0
    %1148 = vmatpush1.bf16.msra.mxu0 0
    %1149 = vmatprep.mubr.bf16.mxu0 0
    %1150 = vmatmul.mubr.bf16.gmra.mrb[0].mxu0 %v916
    %v1151 = vpop.f32.mrb[0].mxu0
    %v1152 = vadd.f32 0.0, %v1151
    %v1153 = vpop.f32.mrb[0].mxu0
    %v1154 = vpop.f32.mrb[0].mxu0
    %v1155 = vpop.f32.mrb[0].mxu0
    %1156 = vdwg.mxu0
    %v1173 = vunpack.c.l.b16 %v1085
    %v1174 = vunpack.c.l.b16 %v1086
    %v1175 = vunpack.c.l.b16 %v1087
    %v1176 = vunpack.c.l.b16 %v1088
    %v1177 = vunpack.c.l.b16 %v1089
    %v1178 = vunpack.c.l.b16 %v1090
    %v1179 = vunpack.c.l.b16 %v1091
    %v1180 = vunpack.c.l.b16 %v1092
    %v1181 = vunpack.c.l.b16 %v1093
    %v1182 = vunpack.c.l.b16 %v1094
    %v1183 = vunpack.c.l.b16 %v1095
    %v1184 = vunpack.c.l.b16 %v1096
    %v1185 = vunpack.c.l.b16 %v1097
    %v1186 = vunpack.c.l.b16 %v1098
    %v1187 = vunpack.c.l.b16 %v1099
    %v1188 = vunpack.c.l.b16 %v1100
    %v1189 = vpack.c.b16 %v1174, %v1173
    %v1190 = vpack.c.b16 %v1176, %v1175
    %v1191 = vpack.c.b16 %v1178, %v1177
    %v1192 = vpack.c.b16 %v1180, %v1179
    %v1193 = vpack.c.b16 %v1182, %v1181
    %v1194 = vpack.c.b16 %v1184, %v1183
    %v1195 = vpack.c.b16 %v1186, %v1185
    %v1196 = vpack.c.b16 %v1188, %v1187
    %1205 = vmatprep.subr.bf16.mxu0 0
    %1206 = vmatpush1.bf16.msra.mxu0 %v1189
    %1207 = vmatprep.subr.bf16.mxu0 0
    %1208 = vmatpush1.bf16.msra.mxu0 %v1190
    %1209 = vmatprep.subr.bf16.mxu0 0
    %1210 = vmatpush1.bf16.msra.mxu0 %v1191
    %1211 = vmatprep.subr.bf16.mxu0 0
    %1212 = vmatpush1.bf16.msra.mxu0 %v1192
    %1213 = vmatprep.subr.bf16.mxu0 0
    %1214 = vmatpush1.bf16.msra.mxu0 %v1193
    %1215 = vmatprep.subr.bf16.mxu0 0
    %1216 = vmatpush1.bf16.msra.mxu0 %v1194
    %1217 = vmatprep.subr.bf16.mxu0 0
    %1218 = vmatpush1.bf16.msra.mxu0 %v1195
    %1219 = vmatprep.subr.bf16.mxu0 0
    %1220 = vmatpush1.bf16.msra.mxu0 %v1196
    %1221 = vmatprep.subr.bf16.mxu0 0
    %1222 = vmatpush1.bf16.msra.mxu0 0
    %1223 = vmatprep.subr.bf16.mxu0 0
    %1224 = vmatpush1.bf16.msra.mxu0 0
    %1225 = vmatprep.subr.bf16.mxu0 0
    %1226 = vmatpush1.bf16.msra.mxu0 0
    %1227 = vmatprep.subr.bf16.mxu0 0
    %1228 = vmatpush1.bf16.msra.mxu0 0
    %1229 = vmatprep.subr.bf16.mxu0 0
    %1230 = vmatpush1.bf16.msra.mxu0 0
    %1231 = vmatprep.subr.bf16.mxu0 0
    %1232 = vmatpush1.bf16.msra.mxu0 0
    %1233 = vmatprep.subr.bf16.mxu0 0
    %1234 = vmatpush1.bf16.msra.mxu0 0
    %1235 = vmatprep.subr.bf16.mxu0 0
    %1236 = vmatpush1.bf16.msra.mxu0 0
    %1237 = vmatprep.mubr.bf16.mxu0 0
    %1238 = vmatmul.mubr.bf16.gmra.mrb[0].mxu0 %v1084
    %v1239 = vpop.f32.mrb[0].mxu0
    %v1240 = vadd.f32 %v1152, %v1239
    %v1241 = vpop.f32.mrb[0].mxu0
    %v1242 = vpop.f32.mrb[0].mxu0
    %v1243 = vpop.f32.mrb[0].mxu0
    %1244 = vdwg.mxu0
    %v1245 = vld [vmem:[%s14] sm:$0x1]
    %v1247 = vlaneseq
    %v1248 = vshrl.u32 %v1247, 7
    %v1249 = vsub.s32 0, %v1248
    %v1250 = vrot.slane %v1245, %v1249
    %v1252 = vadd.f32 %v1240, %v1250
    %v1253 = vpack.c.bf16 %v1252, %v1252
    %v1254 = vld [vmem:[%s15] sm:$0xf]
    %v1255 = vld [vmem:[%s15 + $0x4] sm:$0xf]
    %v1256 = vld [vmem:[%s15 + $0x8] sm:$0xf]
    %v1257 = vld [vmem:[%s15 + $0xc] sm:$0xf]
    %v1258 = vld [vmem:[%s15 + $0x10] sm:$0xf]
    %v1259 = vld [vmem:[%s15 + $0x14] sm:$0xf]
    %v1260 = vld [vmem:[%s15 + $0x18] sm:$0xf]
    %v1261 = vld [vmem:[%s15 + $0x1c] sm:$0xf]
    %v1262 = vld [vmem:[%s15 + $0x20] sm:$0xf]
    %v1263 = vld [vmem:[%s15 + $0x24] sm:$0xf]
    %v1264 = vld [vmem:[%s15 + $0x28] sm:$0xf]
    %v1265 = vld [vmem:[%s15 + $0x2c] sm:$0xf]
    %v1266 = vld [vmem:[%s15 + $0x30] sm:$0xf]
    %v1267 = vld [vmem:[%s15 + $0x34] sm:$0xf]
    %v1268 = vld [vmem:[%s15 + $0x38] sm:$0xf]
    %v1269 = vld [vmem:[%s15 + $0x3c] sm:$0xf]
    %v1270 = vld [vmem:[%s16] sm:$0x1]
    %v1272 = vlaneseq
    %v1273 = vshrl.u32 %v1272, 7
    %v1274 = vsub.s32 0, %v1273
    %v1275 = vrot.slane %v1270, %v1274
    %v1293 = vunpack.c.l.b16 %v1254
    %v1294 = vunpack.c.l.b16 %v1255
    %v1295 = vunpack.c.l.b16 %v1256
    %v1296 = vunpack.c.l.b16 %v1257
    %v1297 = vunpack.c.l.b16 %v1258
    %v1298 = vunpack.c.l.b16 %v1259
    %v1299 = vunpack.c.l.b16 %v1260
    %v1300 = vunpack.c.l.b16 %v1261
    %v1301 = vunpack.c.l.b16 %v1262
    %v1302 = vunpack.c.l.b16 %v1263
    %v1303 = vunpack.c.l.b16 %v1264
    %v1304 = vunpack.c.l.b16 %v1265
    %v1305 = vunpack.c.l.b16 %v1266
    %v1306 = vunpack.c.l.b16 %v1267
    %v1307 = vunpack.c.l.b16 %v1268
    %v1308 = vunpack.c.l.b16 %v1269
    %v1309 = vpack.c.b16 %v1294, %v1293
    %v1310 = vpack.c.b16 %v1296, %v1295
    %v1311 = vpack.c.b16 %v1298, %v1297
    %v1312 = vpack.c.b16 %v1300, %v1299
    %v1313 = vpack.c.b16 %v1302, %v1301
    %v1314 = vpack.c.b16 %v1304, %v1303
    %v1315 = vpack.c.b16 %v1306, %v1305
    %v1316 = vpack.c.b16 %v1308, %v1307
    %1325 = vmatprep.subr.bf16.mxu0 0
    %1326 = vmatpush1.bf16.msra.mxu0 %v1309
    %1327 = vmatprep.subr.bf16.mxu0 0
    %1328 = vmatpush1.bf16.msra.mxu0 %v1310
    %1329 = vmatprep.subr.bf16.mxu0 0
    %1330 = vmatpush1.bf16.msra.mxu0 %v1311
    %1331 = vmatprep.subr.bf16.mxu0 0
    %1332 = vmatpush1.bf16.msra.mxu0 %v1312
    %1333 = vmatprep.subr.bf16.mxu0 0
    %1334 = vmatpush1.bf16.msra.mxu0 %v1313
    %1335 = vmatprep.subr.bf16.mxu0 0
    %1336 = vmatpush1.bf16.msra.mxu0 %v1314
    %1337 = vmatprep.subr.bf16.mxu0 0
    %1338 = vmatpush1.bf16.msra.mxu0 %v1315
    %1339 = vmatprep.subr.bf16.mxu0 0
    %1340 = vmatpush1.bf16.msra.mxu0 %v1316
    %1341 = vmatprep.subr.bf16.mxu0 0
    %1342 = vmatpush1.bf16.msra.mxu0 0
    %1343 = vmatprep.subr.bf16.mxu0 0
    %1344 = vmatpush1.bf16.msra.mxu0 0
    %1345 = vmatprep.subr.bf16.mxu0 0
    %1346 = vmatpush1.bf16.msra.mxu0 0
    %1347 = vmatprep.subr.bf16.mxu0 0
    %1348 = vmatpush1.bf16.msra.mxu0 0
    %1349 = vmatprep.subr.bf16.mxu0 0
    %1350 = vmatpush1.bf16.msra.mxu0 0
    %1351 = vmatprep.subr.bf16.mxu0 0
    %1352 = vmatpush1.bf16.msra.mxu0 0
    %1353 = vmatprep.subr.bf16.mxu0 0
    %1354 = vmatpush1.bf16.msra.mxu0 0
    %1355 = vmatprep.subr.bf16.mxu0 0
    %1356 = vmatpush1.bf16.msra.mxu0 0
    %1357 = vmatprep.mubr.bf16.mxu0 0
    %1358 = vmatmul.mubr.bf16.gmra.mrb[0].mxu0 %v1253
    %v1359 = vpop.f32.mrb[0].mxu0
    %v1360 = vadd.f32 %v1275, %v1359
    %v1361 = vpop.f32.mrb[0].mxu0
    %v1362 = vpop.f32.mrb[0].mxu0
    %v1363 = vpop.f32.mrb[0].mxu0
    %1364 = vdwg.mxu0
    %v1365 = vld [vmem:[%s17] sm:$0x1]
    %v1367 = vlaneseq
    %v1368 = vshrl.u32 %v1367, 7
    %v1369 = vsub.s32 0, %v1368
    %v1370 = vrot.slane %v1365, %v1369
    %v1372 = vmul.f32 %v1360, %v1370
    %vm1373 = vcmask 523264
    %v1374 = vsel %vm1373, %v1372, 0.0
    %1375 = vadd.xlane.f32.xlu0 %v1374
    %v1376 = vpop.xlane.xlu0 %1375
    %s1377 = sld [smem:[#allocation2]]
    %v1378 = vstv %s1377
    %v1379 = vadd.f32 %v1376, %v1378
    %v1380 = vxor.u32 %v1379, 2147483648
    %v1381 = vmul.f32 %v1380, 1.442695
    %v1382 = vpow.pop %v1381
    %v1383 = vadd.f32 %v1382, 1.0
    %v1384 = vrcp.pop %v1383
    %v1385 = vmul.f32 1.0, %v1384
    %1386 = vst.msk [vmem:[%s19] sm:$0xff] %vm1060, %v1385
    // Predicated region
    $region78: #{tpu_custom_call.1} parent=1 // pred_check
      _
    $region79: #{tpu_custom_call.1} parent=1 // pred_check_branch
      %1388 = sbr.rel (0) target = $region81
    $region80: #{tpu_custom_call.1} parent=1 // pred_region
      _
    $region81: #{tpu_custom_call.1} parent=1 // pred_fallthru
      _
    // Predicated region
    $region82: #{tpu_custom_call.1} parent=1 // pred_check
      _
    $region83: #{tpu_custom_call.1} parent=1 // pred_check_branch
      %1390 = sbr.rel (0) target = $region85
    $region84: #{tpu_custom_call.1} parent=1 // pred_region
      %s1392 = ssub.s32 128, 128
      %1393 = vsyncadd [#allocation4], %s1392
      %s1395 = sshll.u32 [#allocation3], 4
      %s1396 = int_to_ptr.vmem [resolvable:$true] %s1395
      %1398 = dma.vmem_to_hbm [thread:$0]  %s1396, 128, %s20, [#allocation4]
    $region85: #{tpu_custom_call.1} parent=1 // pred_fallthru
      _
    // Predicated region
    $region86: #{tpu_custom_call.1} parent=1 // pred_check
      _
    $region87: #{tpu_custom_call.1} parent=1 // pred_check_branch
      %1400 = sbr.rel (0) target = $region89
    $region88: #{tpu_custom_call.1} parent=1 // pred_region
      _
    $region89: #{tpu_custom_call.1} parent=1 // pred_fallthru
      _
    // Predicated region
    $region90: #{tpu_custom_call.1} parent=1 // pred_check
      _
    $region91: #{tpu_custom_call.1} parent=1 // pred_check_branch
      %1402 = sbr.rel (0) target = $region93
    $region92: #{tpu_custom_call.1} parent=1 // pred_region
      _
    $region93: #{tpu_custom_call.1} parent=1 // pred_fallthru
      _
    // Predicated region
    $region94: #{tpu_custom_call.1} parent=1 // pred_check
      _
    $region95: #{tpu_custom_call.1} parent=1 // pred_check_branch
      %1404 = sbr.rel (0) target = $region97
    $region96: #{tpu_custom_call.1} parent=1 // pred_region
      %1405 = dma.done [#allocation4], 128
    $region97: #{tpu_custom_call.1} parent=1 // pred_fallthru
      _
    // Predicated region
    $region98: #{tpu_custom_call.1} parent=1 // pred_check
      _
    $region99: #{tpu_custom_call.1} parent=1 // pred_check_branch
      %1407 = sbr.rel (0) target = $region101
    $region100: #{tpu_custom_call.1} parent=1 // pred_region
      _
    $region101: #{tpu_custom_call.1} parent=1 // pred_fallthru
      _
    %1408 = vsyncpa [#allocation4], 1

</llo_original>
